<compile_context>
chip_gen: v7x
topology: tpu7x:2x2x1
jax: 0.10.0
libtpu: 0.0.40
codegen_flags: <defaults>
</compile_context>

<pallas_src>
import numpy as np
import jax
import jax.numpy as jnp
from jax.experimental import pallas as pl
from jax.experimental.pallas import tpu as pltpu

# ----- KaldiFbank.__init__ defaults --------------------------------------
SAMP_FREQ = 16000.0
FRAME_SHIFT_MS = 10.0
FRAME_LENGTH_MS = 25.0
PREEMPH_COEFF = 0.97
REMOVE_DC_OFFSET = True
NUM_BINS = 23
LOW_FREQ = 20.0
HIGH_FREQ = 0.0          # <=0 means offset from Nyquist -> 8000 Hz
USE_LOG_FBANK = True
USE_POWER = True
CMVN = True
NORM_VAR = False
CMVN_EPS = 1e-8

FRAME_SHIFT = int(SAMP_FREQ * 0.001 * FRAME_SHIFT_MS)    # 160 samples
FRAME_LENGTH = int(SAMP_FREQ * 0.001 * FRAME_LENGTH_MS)  # 400 samples


def _next_pow2(n):
    p = 1
    while p < n:
        p *= 2
    return p


NFFT = _next_pow2(FRAME_LENGTH)       # 512 (round_to_power_of_two=True)
K_BINS = NFFT // 2                    # 256 bins kept (Nyquist bin has zero mel weight)
FLT_EPS = float(np.finfo(np.float32).eps)

MAX_FRAMES_PER_TILE = 512             # bound per-tile VMEM; good MXU N occupancy


def _round_up(x, m):
    return ((x + m - 1) // m) * m


def _cdiv(a, b):
    return -(-a // b)


# ----- constant (parameter) construction (float64 fold -> float32) -------
def _mel_banks(num_bins, nfft, samp_freq, low_freq, high_freq):
    def mel(freq):
        return 1127.0 * np.log(1.0 + freq / 700.0)

    nyquist = 0.5 * samp_freq
    if high_freq <= 0.0:
        high_freq = nyquist + high_freq
    num_fft_bins = nfft // 2
    fft_bin_width = samp_freq / nfft
    mel_low = mel(low_freq)
    mel_high = mel(high_freq)
    delta = (mel_high - mel_low) / (num_bins + 1)
    banks = np.zeros((nfft // 2 + 1, num_bins), dtype=np.float64)
    for b in range(num_bins):
        left = mel_low + b * delta
        center = left + delta
        right = center + delta
        for i in range(num_fft_bins):
            m = mel(fft_bin_width * i)
            if left < m < right:
                if m <= center:
                    w = (m - left) / (center - left)
                else:
                    w = (right - m) / (right - center)
                banks[i, b] = w
    return banks


def _build_constants():
    L = FRAME_LENGTH
    # Povey window
    n = np.arange(L, dtype=np.float64)
    a = 2.0 * np.pi / (L - 1)
    win = np.power(0.5 - 0.5 * np.cos(a * n), 0.85)
    # Preemphasis (column-vector convention out = P @ x):
    #   out[j] = x[j] - c*x[j-1] (j>=1), out[0] = x[0] - c*x[0]
    P = np.eye(L, dtype=np.float64)
    P[0, 0] = 1.0 - PREEMPH_COEFF
    P[np.arange(1, L), np.arange(0, L - 1)] = -PREEMPH_COEFF
    # DC-offset removal: out = x - mean(x)
    if REMOVE_DC_OFFSET:
        D = np.eye(L, dtype=np.float64) - np.full((L, L), 1.0 / L)
    else:
        D = np.eye(L, dtype=np.float64)
    # Real-input DFT of the zero-padded frame (only first L rows matter),
    # Nyquist bin dropped (K_BINS = 256), cos|sin concatenated.
    nn = np.arange(L, dtype=np.float64)[:, None]
    kk = np.arange(K_BINS, dtype=np.float64)[None, :]
    ang = 2.0 * np.pi * nn * kk / NFFT
    C = np.concatenate([np.cos(ang), -np.sin(ang)], axis=1)          # (L, 2K)
    # Fold scale + DC removal + preemphasis + window into the DFT matrix.
    T = 32768.0 * np.diag(win) @ P @ D                               # (L, L)
    analysis_t = (C.T @ T).astype(np.float32)                        # (2K, L)
    mel = _mel_banks(NUM_BINS, NFFT, SAMP_FREQ, LOW_FREQ, HIGH_FREQ)[:K_BINS, :]
    mel_t = np.ascontiguousarray(mel.T)                               # (M, K)
    if USE_POWER:
        # [mel | mel] so that  mel @ (re^2 + im^2)  ==  mel2 @ (y * y)
        mel_rhs = np.concatenate([mel_t, mel_t], axis=1).astype(np.float32)  # (M, 2K)
    else:
        mel_rhs = mel_t.astype(np.float32)                            # (M, K)
    return analysis_t, mel_rhs


_ANALYSIS_T, _MEL_RHS = _build_constants()


# ----- Pallas kernel -------------------------------------------------------
def _make_fbank_cmvn_kernel(tf_tile, num_valid_frames):
    """Fused log-mel + CMVN kernel over grid (B, NT)."""
    inv_n = np.float32(1.0 / float(num_valid_frames))

    def kernel(f_ref, a_ref, mel_ref, out_ref, sum_ref):
        # f_ref:   (1, 400, TF)    frames, frame index on lanes
        # a_ref:   (512, 400)      folded (scale+DC+preemph+window+rDFT) matrix
        # mel_ref: (23, 512)       [mel | mel] (power path) filterbank
        # out_ref: (1, 23, F_pad)  resident across the frame-tile axis
        # sum_ref: (23, 1)         running sum over valid frames (for CMVN)
        t = pl.program_id(1)

        if CMVN:
            @pl.when(t == 0)
            def _():
                sum_ref[...] = jnp.zeros_like(sum_ref)

        # Folded analysis: (512, 400) @ (400, TF) -> (512, TF) = [re; im]
        y = jnp.dot(a_ref[...], f_ref[0], preferred_element_type=jnp.float32)

        if USE_POWER:
            # mel @ (re^2 + im^2) == [mel|mel] @ (y*y):  (23, 512) @ (512, TF)
            logmel = jnp.dot(mel_ref[...], y * y,
                             preferred_element_type=jnp.float32)
        else:
            re = y[0:K_BINS, :]
            im = y[K_BINS:2 * K_BINS, :]
            mag = jnp.sqrt(re * re + im * im)
            logmel = jnp.dot(mel_ref[...], mag,
                             preferred_element_type=jnp.float32)

        if USE_LOG_FBANK:
            logmel = jnp.log(jnp.maximum(logmel, FLT_EPS))

        # Lane-aligned store of this frame tile into the resident output block.
        start = pl.multiple_of(t * tf_tile, 128)
        out_ref[0, :, pl.ds(start, tf_tile)] = logmel

        if CMVN:
            # Accumulate per-mel sum over valid (non-padded) frames.
            col = jax.lax.broadcasted_iota(jnp.int32, logmel.shape, 1) + t * tf_tile
            valid = col < num_valid_frames
            sum_ref[...] += jnp.sum(jnp.where(valid, logmel, 0.0),
                                    axis=1, keepdims=True)

            @pl.when(t == pl.num_programs(1) - 1)
            def _():
                mean = sum_ref[...] * inv_n
                centered = out_ref[0] - mean                       # (23, F_pad)
                if NORM_VAR:
                    colf = jax.lax.broadcasted_iota(jnp.int32, centered.shape, 1)
                    d = jnp.where(colf < num_valid_frames, centered, 0.0)
                    var = jnp.sum(d * d, axis=1, keepdims=True) * inv_n
                    centered = centered * jax.lax.rsqrt(var + CMVN_EPS)
                out_ref[0] = centered

    return kernel


# ----- wrapper ------------------------------------------------------------
def kaldi_fbank(input_signal):
    """input_signal: (B, N) float32 waveform -> (B, NUM_BINS, num_frames) float32."""
    input_signal = input_signal.astype(jnp.float32)
    B, N = input_signal.shape
    assert N >= FRAME_LENGTH, "signal shorter than one frame"
    F = 1 + (N - FRAME_LENGTH) // FRAME_SHIFT          # snip_edges=True frame count

    # Frame-axis tiling: TF is a multiple of 128 (lane-dense stores), <= 512.
    NT = max(1, _cdiv(F, MAX_FRAMES_PER_TILE))
    TF = _round_up(_cdiv(F, NT), 128)
    F_pad = NT * TF

    # Framing gather, already transposed to (B, 400, F_pad) so the frame index
    # lands on lanes. Padded frames use clamped indices; they are excluded from
    # the CMVN mean in-kernel and sliced off at the end.
    idx = (np.arange(F_pad, dtype=np.int64)[None, :] * FRAME_SHIFT
           + np.arange(FRAME_LENGTH, dtype=np.int64)[:, None])       # (400, F_pad)
    idx = np.minimum(idx, N - 1).astype(np.int32)
    frames_t = input_signal[:, idx]                                  # (B, 400, F_pad)

    a_t = jnp.asarray(_ANALYSIS_T)                                   # (512, 400)
    mel_rhs = jnp.asarray(_MEL_RHS)                                  # (23, 512)

    feats = pl.pallas_call(
        _make_fbank_cmvn_kernel(TF, F),
        out_shape=jax.ShapeDtypeStruct((B, NUM_BINS, F_pad), jnp.float32),
        grid=(B, NT),
        in_specs=[
            pl.BlockSpec((1, FRAME_LENGTH, TF), lambda b, t: (b, 0, t)),
            pl.BlockSpec(_ANALYSIS_T.shape, lambda b, t: (0, 0)),
            pl.BlockSpec(_MEL_RHS.shape, lambda b, t: (0, 0)),
        ],
        # Output block index is constant across the frame-tile axis -> the
        # whole (1, 23, F_pad) slab stays resident in VMEM for the CMVN pass
        # and is written back to HBM once per batch element.
        out_specs=pl.BlockSpec((1, NUM_BINS, F_pad), lambda b, t: (b, 0, 0)),
        scratch_shapes=[pltpu.VMEM((NUM_BINS, 1), jnp.float32)],
        compiler_params=pltpu.CompilerParams(
            dimension_semantics=("parallel", "arbitrary")),
    )(frames_t, a_t, mel_rhs)

    # Drop frame padding: final layout (B, C=NUM_BINS, T=F) == features.transpose(1, 2).
    return feats[:, :, :F]


if __name__ == "__main__":
    key = jax.random.PRNGKey(0)
    B, N = 2, 4000  # 0.25 s of 16 kHz audio -> 23 frames of 400 samples
    sig = jax.random.uniform(key, (B, N), dtype=jnp.float32, minval=-1.0, maxval=1.0)

    feats = kaldi_fbank(sig)
    feats = jax.block_until_ready(feats)

    expected_frames = 1 + (N - FRAME_LENGTH) // FRAME_SHIFT
    assert feats.shape == (B, NUM_BINS, expected_frames), feats.shape
    assert feats.dtype == jnp.float32
    assert bool(jnp.all(jnp.isfinite(feats)))
    if CMVN and not NORM_VAR:
        # CMVN sanity: per-(batch, mel) mean over time should be ~0.
        assert bool(jnp.all(jnp.abs(jnp.mean(feats, axis=2)) < 1e-3))
    print("KERNEL_OK")
</pallas_src>

<mosaic_0001>
module attributes {stable_mosaic.version = 11 : i64} {
  func.func @kernel(%arg0: i32, %arg1: i32, %arg2: memref<1x400x128xf32, #tpu.memory_space<vmem>>, %arg3: memref<512x400xf32, #tpu.memory_space<vmem>>, %arg4: memref<23x512xf32, #tpu.memory_space<vmem>>, %arg5: memref<1x23x128xf32, #tpu.memory_space<vmem>>, %arg6: memref<23x1xf32, #tpu.memory_space<vmem>>) attributes {dimension_semantics = [#tpu.dimension_semantics<parallel>, #tpu.dimension_semantics<arbitrary>], iteration_bounds = array<i64: 2, 1>, scalar_prefetch = 0 : i64, scratch_operands = 1 : i64, tpu.core_type = #tpu.core_type<tc>, window_params = [{transform_indices = @transform_0, window_bounds = array<i64: 1, 400, 128>}, {pipeline_mode = #tpu.pipeline_mode<synchronous>, transform_indices = @transform_1, window_bounds = array<i64: 512, 400>}, {pipeline_mode = #tpu.pipeline_mode<synchronous>, transform_indices = @transform_2, window_bounds = array<i64: 23, 512>}, {transform_indices = @transform_3, window_bounds = array<i64: 1, 23, 128>}]} {
    %c0_i32 = arith.constant 0 : i32
    %0 = arith.cmpi eq, %arg1, %c0_i32 : i32
    %1 = arith.extui %0 : i1 to i32
    %c0_i32_0 = arith.constant 0 : i32
    %2 = arith.cmpi ne, %1, %c0_i32_0 : i32
    scf.if %2 {
      %cst_20 = arith.constant 0.000000e+00 : f32
      %35 = vector.broadcast %cst_20 : f32 to vector<23x1xf32>
      %c0_21 = arith.constant 0 : index
      %c0_22 = arith.constant 0 : index
      %36 = vector.load %arg6[%c0_21, %c0_22] : memref<23x1xf32, #tpu.memory_space<vmem>>, vector<23x1xf32>
      tpu.vector_store %arg6[%c0_21, %c0_22], %35 {strides = array<i32>} : memref<23x1xf32, #tpu.memory_space<vmem>>, vector<23x1xf32>,
    } else {
    }
    %c0 = arith.constant 0 : index
    %c0_1 = arith.constant 0 : index
    %3 = vector.load %arg3[%c0, %c0_1] : memref<512x400xf32, #tpu.memory_space<vmem>>, vector<512x400xf32>
    %c0_2 = arith.constant 0 : index
    %c0_3 = arith.constant 0 : index
    %c0_4 = arith.constant 0 : index
    %4 = vector.load %arg2[%c0_2, %c0_3, %c0_4] : memref<1x400x128xf32, #tpu.memory_space<vmem>>, vector<1x400x128xf32>
    %5 = vector.shape_cast %4 : vector<1x400x128xf32> to vector<400x128xf32>
    %cst = arith.constant dense<0.000000e+00> : vector<512x128xf32>
    %6 = tpu.matmul %3, %5, %cst {dimension_numbers = #tpu.dot_dimension_numbers<[1], [0], [0], [1], [0, 0, 1, 1], [], []>} : vector<512x400xf32>, vector<400x128xf32>, vector<512x128xf32> -> vector<512x128xf32>
    %c0_5 = arith.constant 0 : index
    %c0_6 = arith.constant 0 : index
    %7 = vector.load %arg4[%c0_5, %c0_6] : memref<23x512xf32, #tpu.memory_space<vmem>>, vector<23x512xf32>
    %8 = arith.mulf %6, %6 : vector<512x128xf32>
    %cst_7 = arith.constant dense<0.000000e+00> : vector<23x128xf32>
    %9 = tpu.matmul %7, %8, %cst_7 {dimension_numbers = #tpu.dot_dimension_numbers<[1], [0], [0], [1], [0, 0, 1, 1], [], []>} : vector<23x512xf32>, vector<512x128xf32>, vector<23x128xf32> -> vector<23x128xf32>
    %cst_8 = arith.constant 1.1920929E-7 : f32
    %10 = vector.broadcast %cst_8 : f32 to vector<23x128xf32>
    %11 = arith.maximumf %9, %10 : vector<23x128xf32>
    %12 = math.log %11 : vector<23x128xf32>
    %c128_i32 = arith.constant 128 : i32
    %13 = arith.muli %arg1, %c128_i32 : i32
    %14 = tpu.assume_multiple %13, 128 : i32
    %c0_9 = arith.constant 0 : index
    %c0_10 = arith.constant 0 : index
    %15 = arith.index_cast %14 : i32 to index
    %16 = vector.load %arg5[%c0_9, %c0_10, %15] : memref<1x23x128xf32, #tpu.memory_space<vmem>>, vector<1x23x128xf32>
    %17 = vector.shape_cast %16 : vector<1x23x128xf32> to vector<23x128xf32>
    %18 = vector.shape_cast %12 : vector<23x128xf32> to vector<1x23x128xf32>
    tpu.vector_store %arg5[%c0_9, %c0_10, %15], %18 {strides = array<i32>} : memref<1x23x128xf32, #tpu.memory_space<vmem>>, vector<1x23x128xf32>,
    %19 = tpu.iota {dimensions = array<i32: 1>} : vector<23x128xi32>
    %c128_i32_11 = arith.constant 128 : i32
    %20 = arith.muli %arg1, %c128_i32_11 : i32
    %21 = vector.broadcast %20 : i32 to vector<23x128xi32>
    %22 = arith.addi %19, %21 : vector<23x128xi32>
    %c23_i32 = arith.constant 23 : i32
    %23 = vector.broadcast %c23_i32 : i32 to vector<23x128xi32>
    %24 = arith.cmpi slt, %22, %23 : vector<23x128xi32>
    %c0_12 = arith.constant 0 : index
    %c0_13 = arith.constant 0 : index
    %25 = vector.load %arg6[%c0_12, %c0_13] : memref<23x1xf32, #tpu.memory_space<vmem>>, vector<23x1xf32>
    %cst_14 = arith.constant 0.000000e+00 : f32
    %26 = vector.broadcast %cst_14 : f32 to vector<23x128xf32>
    %27 = arith.select %24, %12, %26 : vector<23x128xi1>, vector<23x128xf32>
    %cst_15 = arith.constant dense<0.000000e+00> : vector<23xf32>
    %28 = vector.multi_reduction <add>, %27, %cst_15 [1] : vector<23x128xf32> to vector<23xf32>
    %29 = vector.shape_cast %28 : vector<23xf32> to vector<23x1xf32>
    %30 = arith.addf %25, %29 : vector<23x1xf32>
    %c0_16 = arith.constant 0 : index
    %c0_17 = arith.constant 0 : index
    %31 = vector.load %arg6[%c0_16, %c0_17] : memref<23x1xf32, #tpu.memory_space<vmem>>, vector<23x1xf32>
    tpu.vector_store %arg6[%c0_16, %c0_17], %30 {strides = array<i32>} : memref<23x1xf32, #tpu.memory_space<vmem>>, vector<23x1xf32>,
    %c0_i32_18 = arith.constant 0 : i32
    %32 = arith.cmpi eq, %arg1, %c0_i32_18 : i32
    %33 = arith.extui %32 : i1 to i32
    %c0_i32_19 = arith.constant 0 : i32
    %34 = arith.cmpi ne, %33, %c0_i32_19 : i32
    scf.if %34 {
      %c0_20 = arith.constant 0 : index
      %c0_21 = arith.constant 0 : index
      %35 = vector.load %arg6[%c0_20, %c0_21] : memref<23x1xf32, #tpu.memory_space<vmem>>, vector<23x1xf32>
      %cst_22 = arith.constant 0.0434782617 : f32
      %36 = vector.broadcast %cst_22 : f32 to vector<23x1xf32>
      %37 = arith.mulf %35, %36 : vector<23x1xf32>
      %c0_23 = arith.constant 0 : index
      %c0_24 = arith.constant 0 : index
      %c0_25 = arith.constant 0 : index
      %38 = vector.load %arg5[%c0_23, %c0_24, %c0_25] : memref<1x23x128xf32, #tpu.memory_space<vmem>>, vector<1x23x128xf32>
      %39 = vector.shape_cast %38 : vector<1x23x128xf32> to vector<23x128xf32>
      %40 = vector.broadcast %37 : vector<23x1xf32> to vector<23x128xf32>
      %41 = arith.subf %39, %40 : vector<23x128xf32>
      %c0_26 = arith.constant 0 : index
      %c0_27 = arith.constant 0 : index
      %c0_28 = arith.constant 0 : index
      %42 = vector.load %arg5[%c0_26, %c0_27, %c0_28] : memref<1x23x128xf32, #tpu.memory_space<vmem>>, vector<1x23x128xf32>
      %43 = vector.shape_cast %42 : vector<1x23x128xf32> to vector<23x128xf32>
      %44 = vector.shape_cast %41 : vector<23x128xf32> to vector<1x23x128xf32>
      tpu.vector_store %arg5[%c0_26, %c0_27, %c0_28], %44 {strides = array<i32>} : memref<1x23x128xf32, #tpu.memory_space<vmem>>, vector<1x23x128xf32>,
    } else {
    }
    return
  }
  func.func @transform_0(%arg0: i32, %arg1: i32) -> (i32, i32, i32) {
    %c0_i32 = arith.constant 0 : i32
    %c0_i32_0 = arith.constant 0 : i32
    return %arg0, %c0_i32, %arg1 : i32, i32, i32
  }
  func.func @transform_1(%arg0: i32, %arg1: i32) -> (i32, i32) {
    %c0_i32 = arith.constant 0 : i32
    %c0_i32_0 = arith.constant 0 : i32
    %c0_i32_1 = arith.constant 0 : i32
    return %c0_i32, %c0_i32_0 : i32, i32
  }
  func.func @transform_2(%arg0: i32, %arg1: i32) -> (i32, i32) {
    %c0_i32 = arith.constant 0 : i32
    %c0_i32_0 = arith.constant 0 : i32
    %c0_i32_1 = arith.constant 0 : i32
    return %c0_i32, %c0_i32_0 : i32, i32
  }
  func.func @transform_3(%arg0: i32, %arg1: i32) -> (i32, i32, i32) {
    %c0_i32 = arith.constant 0 : i32
    %c0_i32_0 = arith.constant 0 : i32
    %c0_i32_1 = arith.constant 0 : i32
    return %arg0, %c0_i32, %c0_i32_0 : i32, i32, i32
  }
}

</mosaic_0001>

<llo_original>
// kernel: tpu_custom_call.1
$region0: #{tpu_custom_call.1}
  #allocation0 [shape = 'u32[]', space=smem, size = 0x4, offset = 0x4, fixed_abs, tag = 'smem constant byte address 0x4 - core index']
  #allocation1 [shape = 'u32[144,128]{1,0:T(1,128)}', space=vmem, size = 0x12000, scoped, tag = 'internal scratch']
  #allocation2 [shape = 'f32[23,1]{1,0:T(8,128)}', space=vmem, size = 0x3000, scoped, tag = 'scratch operand']
  %s0 = inlined_call_operand.vmem [shape: f32[2,400,128], index: 0, kind: input, shape index: {}]
  %s1 = inlined_call_operand.vmem [shape: f32[512,400], index: 1, kind: input, shape index: {}]
  %s2 = inlined_call_operand.vmem [shape: f32[23,512], index: 2, kind: input, shape index: {}]
  %s3 = inlined_call_operand.vmem [shape: f32[2,23,128], index: 3, kind: output, shape index: {}]
  %s4 = sld [smem:[#allocation0]]
  $region53: #{tpu_custom_call.1} parent=0
    _
  %s6 = ssub.s32 1, %s4
  %s7 = scalar_select 0, %s6, %s4
  loop: start=0, step=1, limit=4
  $region2: #{tpu_custom_call.1} parent=0 // loop_pre_header
    _
  $region3: #{tpu_custom_call.1} parent=0 // loop_header
    %s9 = sphi 0, %s13
    %p10 = scmp.ge.s32.totalorder %s9, 4
    %s16 = sphi 0, %s28
    %s17 = sphi 0, %s24
    %s18 = sphi 0, %s16
    %s19 = sphi 0, %s17
    %s20 = sphi 0, %s18
    %s21 = sphi 0, %s19
    %s33 = sphi 0, %s35
    %s36 = sphi 0, %s33
    %s37 = sphi 0, %s36
    %s53 = sphi 0, %s37
    %s57 = sphi 0, %s57
    %s59 = sphi 0, %s57
    %s60 = sphi 0, %s59
    %s74 = sphi 0, %s60
    %s78 = sphi 0, %s78
    %s80 = sphi 0, %s78
    %s81 = sphi 0, %s80
    %s95 = sphi 0, %s81
    %s101 = sphi 0, %s103
    %s104 = sphi 0, %s101
    %s105 = sphi 0, %s104
    %s121 = sphi 0, %s105
  $region4: #{tpu_custom_call.1} parent=0 // loop_header_branch
    %12 = sbr.rel (%p10) target = $region8
  $region5: #{tpu_custom_call.1} parent=0 // loop_body
    %s14 = ssub.s32 %s9, 1
    %s15 = ssub.s32 %s9, 2
    %s22 = sadd.s32 1, %s17
    %p23 = scmp.ge.s32.totalorder %s22, 1
    %s24 = scalar_select %p23, 0, %s22
    %s25 = sadd.s32 1, %s16
    %s26 = scalar_select %p23, %s25, %s16
    %p27 = scmp.ge.s32.totalorder %s26, 2
    %s28 = scalar_select %p27, 0, %s26
    %s29 = ssub.s32 %s16, %s28
    %s30 = ssub.s32 %s17, %s24
    %s31 = sor.u32 %s29, %s30
    %p32 = scmp.eq.s32.totalorder %s31, 0
    %s34 = sadd.s32 %s33, 1
    %s35 = scalar_select %p32, %s33, %s34
    %p38 = pneg %p32
    %p39 = scmp.eq.s32.totalorder %s9, 1
    %p40 = por %p38, %p39
    %p41 = scmp.ne.s32.totalorder %s33, %s36
    %p42 = scmp.eq.s32.totalorder %s9, 0
    %p43 = por %p41, %p42
    %p44 = scmp.ne.s32.totalorder %s33, %s36
    %p45 = scmp.eq.s32.totalorder %s14, 1
    %p46 = por %p44, %p45
    %p47 = scmp.ne.s32.totalorder %s36, %s37
    %p48 = scmp.eq.s32.totalorder %s14, 0
    %p49 = por %p47, %p48
    %p50 = scmp.ne.s32.totalorder %s36, %s37
    %p51 = scmp.eq.s32.totalorder %s15, 1
    %p52 = por %p50, %p51
    %p54 = scmp.ne.s32.totalorder %s37, %s53
    %p55 = scmp.eq.s32.totalorder %s15, 0
    %p56 = por %p54, %p55
    %s58 = sadd.s32 %s57, 1
    %p61 = scmp.eq.s32.totalorder %s9, 1
    %p62 = scmp.ne.s32.totalorder %s57, %s59
    %p63 = scmp.eq.s32.totalorder %s9, 0
    %p64 = por %p62, %p63
    %p65 = scmp.ne.s32.totalorder %s57, %s59
    %p66 = scmp.eq.s32.totalorder %s14, 1
    %p67 = por %p65, %p66
    %p68 = scmp.ne.s32.totalorder %s59, %s60
    %p69 = scmp.eq.s32.totalorder %s14, 0
    %p70 = por %p68, %p69
    %p71 = scmp.ne.s32.totalorder %s59, %s60
    %p72 = scmp.eq.s32.totalorder %s15, 1
    %p73 = por %p71, %p72
    %p75 = scmp.ne.s32.totalorder %s60, %s74
    %p76 = scmp.eq.s32.totalorder %s15, 0
    %p77 = por %p75, %p76
    %s79 = sadd.s32 %s78, 1
    %p82 = scmp.eq.s32.totalorder %s9, 1
    %p83 = scmp.ne.s32.totalorder %s78, %s80
    %p84 = scmp.eq.s32.totalorder %s9, 0
    %p85 = por %p83, %p84
    %p86 = scmp.ne.s32.totalorder %s78, %s80
    %p87 = scmp.eq.s32.totalorder %s14, 1
    %p88 = por %p86, %p87
    %p89 = scmp.ne.s32.totalorder %s80, %s81
    %p90 = scmp.eq.s32.totalorder %s14, 0
    %p91 = por %p89, %p90
    %p92 = scmp.ne.s32.totalorder %s80, %s81
    %p93 = scmp.eq.s32.totalorder %s15, 1
    %p94 = por %p92, %p93
    %p96 = scmp.ne.s32.totalorder %s81, %s95
    %p97 = scmp.eq.s32.totalorder %s15, 0
    %p98 = por %p96, %p97
    %s99 = ssub.s32 %s16, %s28
    %p100 = scmp.eq.s32.totalorder %s99, 0
    %s102 = sadd.s32 %s101, 1
    %s103 = scalar_select %p100, %s101, %s102
    %p106 = pneg %p100
    %p107 = scmp.eq.s32.totalorder %s9, 1
    %p108 = por %p106, %p107
    %p109 = scmp.ne.s32.totalorder %s101, %s104
    %p110 = scmp.eq.s32.totalorder %s9, 0
    %p111 = por %p109, %p110
    %p112 = scmp.ne.s32.totalorder %s101, %s104
    %p113 = scmp.eq.s32.totalorder %s14, 1
    %p114 = por %p112, %p113
    %p115 = scmp.ne.s32.totalorder %s104, %s105
    %p116 = scmp.eq.s32.totalorder %s14, 0
    %p117 = por %p115, %p116
    %p118 = scmp.ne.s32.totalorder %s104, %s105
    %p119 = scmp.eq.s32.totalorder %s15, 1
    %p120 = por %p118, %p119
    %p122 = scmp.ne.s32.totalorder %s105, %s121
    %p123 = scmp.eq.s32.totalorder %s15, 0
    %p124 = por %p122, %p123
    %p125 = scmp.le.s32.totalorder 1, %s9
    %p126 = scmp.lt.s32.totalorder %s9, 3
    %p127 = pnand %p125, %p126
    %p128 = pneg %p127
    // Predicated region
    $region9: #{tpu_custom_call.1} parent=5 // pred_check
      _
    $region10: #{tpu_custom_call.1} parent=5 // pred_check_branch
      %130 = sbr.rel (%p127) target = $region12
    $region11: #{tpu_custom_call.1} parent=5 // pred_region
      %s131 = ssub.s32 %s9, 1
      // Predicated region
      $region13: #{tpu_custom_call.1} parent=11 // pred_check
        %p132 = pneg %p70
      $region14: #{tpu_custom_call.1} parent=11 // pred_check_branch
        %134 = sbr.rel (%p132) target = $region16
      $region15: #{tpu_custom_call.1} parent=11 // pred_region
        _
      $region16: #{tpu_custom_call.1} parent=11 // pred_fallthru
        _
      // Predicated region
      $region17: #{tpu_custom_call.1} parent=11 // pred_check
        %p135 = pneg %p91
      $region18: #{tpu_custom_call.1} parent=11 // pred_check_branch
        %137 = sbr.rel (%p135) target = $region20
      $region19: #{tpu_custom_call.1} parent=11 // pred_region
        _
      $region20: #{tpu_custom_call.1} parent=11 // pred_fallthru
        _
    $region12: #{tpu_custom_call.1} parent=5 // pred_fallthru
      _
    %p138 = scmp.lt.s32.totalorder %s9, 2
    // Predicated region
    $region21: #{tpu_custom_call.1} parent=5 // pred_check
      %p139 = pneg %p138
    $region22: #{tpu_custom_call.1} parent=5 // pred_check_branch
      %141 = sbr.rel (%p139) target = $region24
    $region23: #{tpu_custom_call.1} parent=5 // pred_region
      // Predicated region
      $region25: #{tpu_custom_call.1} parent=23 // pred_check
        %p142 = pneg %p43
      $region26: #{tpu_custom_call.1} parent=23 // pred_check_branch
        %144 = sbr.rel (%p142) target = $region28
      $region27: #{tpu_custom_call.1} parent=23 // pred_region
        %p145 = scmp.lt.s32.totalorder %s16, 1
        %s146 = scalar_select %p145, %s16, 1
        %p147 = scmp.lt.s32.totalorder %s17, 0
        %s148 = scalar_select %p147, %s17, 0
        %s149 = smul.addr %s146, 50
        %s150 = sadd.s32 %s148, %s149
        %s151 = smul.addr %s150, 8
        %s152 = scalar_lea.vmem %s0, %s151
      $region28: #{tpu_custom_call.1} parent=23 // pred_fallthru
        _
    $region24: #{tpu_custom_call.1} parent=5 // pred_fallthru
      _
    %p153 = scmp.le.s32.totalorder 1, %s9
    %p154 = scmp.lt.s32.totalorder %s9, 3
    %p155 = pnand %p153, %p154
    %p156 = pneg %p155
    // Predicated region
    $region29: #{tpu_custom_call.1} parent=5 // pred_check
      _
    $region30: #{tpu_custom_call.1} parent=5 // pred_check_branch
      %158 = sbr.rel (%p155) target = $region32
    $region31: #{tpu_custom_call.1} parent=5 // pred_region
      %s159 = ssub.s32 %s9, 1
      %p160 = scmp.lt.s32.totalorder %s18, 1
      %s161 = scalar_select %p160, %s18, 1
      %p162 = scmp.lt.s32.totalorder %s19, 0
      %s163 = scalar_select %p162, %s19, 0
      %s164 = smul.addr %s161, 50
      %s165 = sadd.s32 %s163, %s164
      %s166 = smul.addr %s165, 8
      %s167 = scalar_lea.vmem %s0, %s166
      %p168 = pneg %p49
      %p169 = pneg %p46
      %p170 = pneg %p70
      %p171 = pneg %p67
      %p172 = pneg %p91
      %p173 = pneg %p88
      %p174 = pneg %p117
      %p175 = pneg %p114
      %p176 = scmp.lt.s32.totalorder %s18, 1
      %s177 = scalar_select %p176, %s18, 1
      %s178 = smul.addr %s177, 3
      %s179 = smul.addr %s178, 8
      %s180 = scalar_lea.vmem %s3, %s179
      %p181 = scmp.lt.s32.totalorder %s18, 1
      %s182 = scalar_select %p181, %s18, 1
      %p183 = scmp.lt.s32.totalorder %s19, 0
      %s184 = scalar_select %p183, %s19, 0
      %s185 = smul.addr %s182, 50
      %s186 = sadd.s32 %s184, %s185
      %s187 = smul.addr %s186, 8
      %s188 = scalar_lea.vmem %s0, %s187
      %p189 = scmp.lt.s32.totalorder %s18, 1
      %s190 = scalar_select %p189, %s18, 1
      %s191 = smul.addr %s190, 3
      %s192 = smul.addr %s191, 8
      %s193 = scalar_lea.vmem %s3, %s192
      %p194 = scmp.eq.s32.totalorder %s19, 0
      // Predicated region
      $region33: #{tpu_custom_call.1} parent=31 // pred_check
        %p195 = pneg %p194
      $region34: #{tpu_custom_call.1} parent=31 // pred_check_branch
        %197 = sbr.rel (%p195) target = $region36
      $region35: #{tpu_custom_call.1} parent=31 // pred_region
        %vm198 = vcmask 7168
        %199 = vst.msk [vmem:[#allocation2] sm:$0xff] %vm198, 0.0
        %200 = vst.msk [vmem:[#allocation2 + $0x8] sm:$0xff] %vm198, 0.0
        %vm201 = vcmask 6144
        %202 = vst.msk [vmem:[#allocation2 + $0x10] sm:$0x7f] %vm201, 0.0
      $region36: #{tpu_custom_call.1} parent=31 // pred_fallthru
        _
      %v203 = vld [vmem:[%s1] sm:$0xff]
      %v204 = vld [vmem:[%s1 + $0x8] sm:$0xff]
      %v205 = vld [vmem:[%s1 + $0x10] sm:$0xff]
      %v206 = vld [vmem:[%s1 + $0x18] sm:$0xff]
      %v207 = vld [vmem:[%s1 + $0x20] sm:$0xff]
      %v208 = vld [vmem:[%s1 + $0x28] sm:$0xff]
      %v209 = vld [vmem:[%s1 + $0x30] sm:$0xff]
      %v210 = vld [vmem:[%s1 + $0x38] sm:$0xff]
      %v211 = vld [vmem:[%s1 + $0x40] sm:$0xff]
      %v212 = vld [vmem:[%s1 + $0x48] sm:$0xff]
      %v213 = vld [vmem:[%s1 + $0x50] sm:$0xff]
      %v214 = vld [vmem:[%s1 + $0x58] sm:$0xff]
      %v215 = vld [vmem:[%s1 + $0x60] sm:$0xff]
      %v216 = vld [vmem:[%s1 + $0x68] sm:$0xff]
      %v217 = vld [vmem:[%s1 + $0x70] sm:$0xff]
      %v218 = vld [vmem:[%s1 + $0x78] sm:$0xff]
      %v219 = vld [vmem:[%s1 + $0x80] sm:$0xff]
      %v220 = vld [vmem:[%s1 + $0x88] sm:$0xff]
      %v221 = vld [vmem:[%s1 + $0x90] sm:$0xff]
      %v222 = vld [vmem:[%s1 + $0x98] sm:$0xff]
      %v223 = vld [vmem:[%s1 + $0xa0] sm:$0xff]
      %v224 = vld [vmem:[%s1 + $0xa8] sm:$0xff]
      %v225 = vld [vmem:[%s1 + $0xb0] sm:$0xff]
      %v226 = vld [vmem:[%s1 + $0xb8] sm:$0xff]
      %v227 = vld [vmem:[%s1 + $0xc0] sm:$0xff]
      %v228 = vld [vmem:[%s1 + $0xc8] sm:$0xff]
      %v229 = vld [vmem:[%s1 + $0xd0] sm:$0xff]
      %v230 = vld [vmem:[%s1 + $0xd8] sm:$0xff]
      %v231 = vld [vmem:[%s1 + $0xe0] sm:$0xff]
      %v232 = vld [vmem:[%s1 + $0xe8] sm:$0xff]
      %v233 = vld [vmem:[%s1 + $0xf0] sm:$0xff]
      %v234 = vld [vmem:[%s1 + $0xf8] sm:$0xff]
      %v235 = vld [vmem:[%s1 + $0x100] sm:$0xff]
      %v236 = vld [vmem:[%s1 + $0x108] sm:$0xff]
      %v237 = vld [vmem:[%s1 + $0x110] sm:$0xff]
      %v238 = vld [vmem:[%s1 + $0x118] sm:$0xff]
      %v239 = vld [vmem:[%s1 + $0x120] sm:$0xff]
      %v240 = vld [vmem:[%s1 + $0x128] sm:$0xff]
      %v241 = vld [vmem:[%s1 + $0x130] sm:$0xff]
      %v242 = vld [vmem:[%s1 + $0x138] sm:$0xff]
      %v243 = vld [vmem:[%s1 + $0x140] sm:$0xff]
      %v244 = vld [vmem:[%s1 + $0x148] sm:$0xff]
      %v245 = vld [vmem:[%s1 + $0x150] sm:$0xff]
      %v246 = vld [vmem:[%s1 + $0x158] sm:$0xff]
      %v247 = vld [vmem:[%s1 + $0x160] sm:$0xff]
      %v248 = vld [vmem:[%s1 + $0x168] sm:$0xff]
      %v249 = vld [vmem:[%s1 + $0x170] sm:$0xff]
      %v250 = vld [vmem:[%s1 + $0x178] sm:$0xff]
      %v251 = vld [vmem:[%s1 + $0x180] sm:$0xff]
      %v252 = vld [vmem:[%s1 + $0x188] sm:$0xff]
      %v253 = vld [vmem:[%s1 + $0x190] sm:$0xff]
      %v254 = vld [vmem:[%s1 + $0x198] sm:$0xff]
      %v255 = vld [vmem:[%s1 + $0x1a0] sm:$0xff]
      %v256 = vld [vmem:[%s1 + $0x1a8] sm:$0xff]
      %v257 = vld [vmem:[%s1 + $0x1b0] sm:$0xff]
      %v258 = vld [vmem:[%s1 + $0x1b8] sm:$0xff]
      %v259 = vld [vmem:[%s1 + $0x1c0] sm:$0xff]
      %v260 = vld [vmem:[%s1 + $0x1c8] sm:$0xff]
      %v261 = vld [vmem:[%s1 + $0x1d0] sm:$0xff]
      %v262 = vld [vmem:[%s1 + $0x1d8] sm:$0xff]
      %v263 = vld [vmem:[%s1 + $0x1e0] sm:$0xff]
      %v264 = vld [vmem:[%s1 + $0x1e8] sm:$0xff]
      %v265 = vld [vmem:[%s1 + $0x1f0] sm:$0xff]
      %v266 = vld [vmem:[%s1 + $0x1f8] sm:$0xff]
      %v267 = vld [vmem:[%s1 + $0x200] sm:$0xff]
      %v268 = vld [vmem:[%s1 + $0x208] sm:$0xff]
      %v269 = vld [vmem:[%s1 + $0x210] sm:$0xff]
      %v270 = vld [vmem:[%s1 + $0x218] sm:$0xff]
      %v271 = vld [vmem:[%s1 + $0x220] sm:$0xff]
      %v272 = vld [vmem:[%s1 + $0x228] sm:$0xff]
      %v273 = vld [vmem:[%s1 + $0x230] sm:$0xff]
      %v274 = vld [vmem:[%s1 + $0x238] sm:$0xff]
      %v275 = vld [vmem:[%s1 + $0x240] sm:$0xff]
      %v276 = vld [vmem:[%s1 + $0x248] sm:$0xff]
      %v277 = vld [vmem:[%s1 + $0x250] sm:$0xff]
      %v278 = vld [vmem:[%s1 + $0x258] sm:$0xff]
      %v279 = vld [vmem:[%s1 + $0x260] sm:$0xff]
      %v280 = vld [vmem:[%s1 + $0x268] sm:$0xff]
      %v281 = vld [vmem:[%s1 + $0x270] sm:$0xff]
      %v282 = vld [vmem:[%s1 + $0x278] sm:$0xff]
      %v283 = vld [vmem:[%s1 + $0x280] sm:$0xff]
      %v284 = vld [vmem:[%s1 + $0x288] sm:$0xff]
      %v285 = vld [vmem:[%s1 + $0x290] sm:$0xff]
      %v286 = vld [vmem:[%s1 + $0x298] sm:$0xff]
      %v287 = vld [vmem:[%s1 + $0x2a0] sm:$0xff]
      %v288 = vld [vmem:[%s1 + $0x2a8] sm:$0xff]
      %v289 = vld [vmem:[%s1 + $0x2b0] sm:$0xff]
      %v290 = vld [vmem:[%s1 + $0x2b8] sm:$0xff]
      %v291 = vld [vmem:[%s1 + $0x2c0] sm:$0xff]
      %v292 = vld [vmem:[%s1 + $0x2c8] sm:$0xff]
      %v293 = vld [vmem:[%s1 + $0x2d0] sm:$0xff]
      %v294 = vld [vmem:[%s1 + $0x2d8] sm:$0xff]
      %v295 = vld [vmem:[%s1 + $0x2e0] sm:$0xff]
      %v296 = vld [vmem:[%s1 + $0x2e8] sm:$0xff]
      %v297 = vld [vmem:[%s1 + $0x2f0] sm:$0xff]
      %v298 = vld [vmem:[%s1 + $0x2f8] sm:$0xff]
      %v299 = vld [vmem:[%s1 + $0x300] sm:$0xff]
      %v300 = vld [vmem:[%s1 + $0x308] sm:$0xff]
      %v301 = vld [vmem:[%s1 + $0x310] sm:$0xff]
      %v302 = vld [vmem:[%s1 + $0x318] sm:$0xff]
      %v303 = vld [vmem:[%s1 + $0x320] sm:$0xff]
      %v304 = vld [vmem:[%s1 + $0x328] sm:$0xff]
      %v305 = vld [vmem:[%s1 + $0x330] sm:$0xff]
      %v306 = vld [vmem:[%s1 + $0x338] sm:$0xff]
      %v307 = vld [vmem:[%s1 + $0x340] sm:$0xff]
      %v308 = vld [vmem:[%s1 + $0x348] sm:$0xff]
      %v309 = vld [vmem:[%s1 + $0x350] sm:$0xff]
      %v310 = vld [vmem:[%s1 + $0x358] sm:$0xff]
      %v311 = vld [vmem:[%s1 + $0x360] sm:$0xff]
      %v312 = vld [vmem:[%s1 + $0x368] sm:$0xff]
      %v313 = vld [vmem:[%s1 + $0x370] sm:$0xff]
      %v314 = vld [vmem:[%s1 + $0x378] sm:$0xff]
      %v315 = vld [vmem:[%s1 + $0x380] sm:$0xff]
      %v316 = vld [vmem:[%s1 + $0x388] sm:$0xff]
      %v317 = vld [vmem:[%s1 + $0x390] sm:$0xff]
      %v318 = vld [vmem:[%s1 + $0x398] sm:$0xff]
      %v319 = vld [vmem:[%s1 + $0x3a0] sm:$0xff]
      %v320 = vld [vmem:[%s1 + $0x3a8] sm:$0xff]
      %v321 = vld [vmem:[%s1 + $0x3b0] sm:$0xff]
      %v322 = vld [vmem:[%s1 + $0x3b8] sm:$0xff]
      %v323 = vld [vmem:[%s1 + $0x3c0] sm:$0xff]
      %v324 = vld [vmem:[%s1 + $0x3c8] sm:$0xff]
      %v325 = vld [vmem:[%s1 + $0x3d0] sm:$0xff]
      %v326 = vld [vmem:[%s1 + $0x3d8] sm:$0xff]
      %v327 = vld [vmem:[%s1 + $0x3e0] sm:$0xff]
      %v328 = vld [vmem:[%s1 + $0x3e8] sm:$0xff]
      %v329 = vld [vmem:[%s1 + $0x3f0] sm:$0xff]
      %v330 = vld [vmem:[%s1 + $0x3f8] sm:$0xff]
      %v331 = vld [vmem:[%s1 + $0x400] sm:$0xff]
      %v332 = vld [vmem:[%s1 + $0x408] sm:$0xff]
      %v333 = vld [vmem:[%s1 + $0x410] sm:$0xff]
      %v334 = vld [vmem:[%s1 + $0x418] sm:$0xff]
      %v335 = vld [vmem:[%s1 + $0x420] sm:$0xff]
      %v336 = vld [vmem:[%s1 + $0x428] sm:$0xff]
      %v337 = vld [vmem:[%s1 + $0x430] sm:$0xff]
      %v338 = vld [vmem:[%s1 + $0x438] sm:$0xff]
      %v339 = vld [vmem:[%s1 + $0x440] sm:$0xff]
      %v340 = vld [vmem:[%s1 + $0x448] sm:$0xff]
      %v341 = vld [vmem:[%s1 + $0x450] sm:$0xff]
      %v342 = vld [vmem:[%s1 + $0x458] sm:$0xff]
      %v343 = vld [vmem:[%s1 + $0x460] sm:$0xff]
      %v344 = vld [vmem:[%s1 + $0x468] sm:$0xff]
      %v345 = vld [vmem:[%s1 + $0x470] sm:$0xff]
      %v346 = vld [vmem:[%s1 + $0x478] sm:$0xff]
      %v347 = vld [vmem:[%s1 + $0x480] sm:$0xff]
      %v348 = vld [vmem:[%s1 + $0x488] sm:$0xff]
      %v349 = vld [vmem:[%s1 + $0x490] sm:$0xff]
      %v350 = vld [vmem:[%s1 + $0x498] sm:$0xff]
      %v351 = vld [vmem:[%s1 + $0x4a0] sm:$0xff]
      %v352 = vld [vmem:[%s1 + $0x4a8] sm:$0xff]
      %v353 = vld [vmem:[%s1 + $0x4b0] sm:$0xff]
      %v354 = vld [vmem:[%s1 + $0x4b8] sm:$0xff]
      %v355 = vld [vmem:[%s1 + $0x4c0] sm:$0xff]
      %v356 = vld [vmem:[%s1 + $0x4c8] sm:$0xff]
      %v357 = vld [vmem:[%s1 + $0x4d0] sm:$0xff]
      %v358 = vld [vmem:[%s1 + $0x4d8] sm:$0xff]
      %v359 = vld [vmem:[%s1 + $0x4e0] sm:$0xff]
      %v360 = vld [vmem:[%s1 + $0x4e8] sm:$0xff]
      %v361 = vld [vmem:[%s1 + $0x4f0] sm:$0xff]
      %v362 = vld [vmem:[%s1 + $0x4f8] sm:$0xff]
      %v363 = vld [vmem:[%s1 + $0x500] sm:$0xff]
      %v364 = vld [vmem:[%s1 + $0x508] sm:$0xff]
      %v365 = vld [vmem:[%s1 + $0x510] sm:$0xff]
      %v366 = vld [vmem:[%s1 + $0x518] sm:$0xff]
      %v367 = vld [vmem:[%s1 + $0x520] sm:$0xff]
      %v368 = vld [vmem:[%s1 + $0x528] sm:$0xff]
      %v369 = vld [vmem:[%s1 + $0x530] sm:$0xff]
      %v370 = vld [vmem:[%s1 + $0x538] sm:$0xff]
      %v371 = vld [vmem:[%s1 + $0x540] sm:$0xff]
      %v372 = vld [vmem:[%s1 + $0x548] sm:$0xff]
      %v373 = vld [vmem:[%s1 + $0x550] sm:$0xff]
      %v374 = vld [vmem:[%s1 + $0x558] sm:$0xff]
      %v375 = vld [vmem:[%s1 + $0x560] sm:$0xff]
      %v376 = vld [vmem:[%s1 + $0x568] sm:$0xff]
      %v377 = vld [vmem:[%s1 + $0x570] sm:$0xff]
      %v378 = vld [vmem:[%s1 + $0x578] sm:$0xff]
      %v379 = vld [vmem:[%s1 + $0x580] sm:$0xff]
      %v380 = vld [vmem:[%s1 + $0x588] sm:$0xff]
      %v381 = vld [vmem:[%s1 + $0x590] sm:$0xff]
      %v382 = vld [vmem:[%s1 + $0x598] sm:$0xff]
      %v383 = vld [vmem:[%s1 + $0x5a0] sm:$0xff]
      %v384 = vld [vmem:[%s1 + $0x5a8] sm:$0xff]
      %v385 = vld [vmem:[%s1 + $0x5b0] sm:$0xff]
      %v386 = vld [vmem:[%s1 + $0x5b8] sm:$0xff]
      %v387 = vld [vmem:[%s1 + $0x5c0] sm:$0xff]
      %v388 = vld [vmem:[%s1 + $0x5c8] sm:$0xff]
      %v389 = vld [vmem:[%s1 + $0x5d0] sm:$0xff]
      %v390 = vld [vmem:[%s1 + $0x5d8] sm:$0xff]
      %v391 = vld [vmem:[%s1 + $0x5e0] sm:$0xff]
      %v392 = vld [vmem:[%s1 + $0x5e8] sm:$0xff]
      %v393 = vld [vmem:[%s1 + $0x5f0] sm:$0xff]
      %v394 = vld [vmem:[%s1 + $0x5f8] sm:$0xff]
      %v395 = vld [vmem:[%s1 + $0x600] sm:$0xff]
      %v396 = vld [vmem:[%s1 + $0x608] sm:$0xff]
      %v397 = vld [vmem:[%s1 + $0x610] sm:$0xff]
      %v398 = vld [vmem:[%s1 + $0x618] sm:$0xff]
      %v399 = vld [vmem:[%s1 + $0x620] sm:$0xff]
      %v400 = vld [vmem:[%s1 + $0x628] sm:$0xff]
      %v401 = vld [vmem:[%s1 + $0x630] sm:$0xff]
      %v402 = vld [vmem:[%s1 + $0x638] sm:$0xff]
      %v403 = vld [vmem:[%s1 + $0x640] sm:$0xff]
      %v404 = vld [vmem:[%s1 + $0x648] sm:$0xff]
      %v405 = vld [vmem:[%s1 + $0x650] sm:$0xff]
      %v406 = vld [vmem:[%s1 + $0x658] sm:$0xff]
      %v407 = vld [vmem:[%s1 + $0x660] sm:$0xff]
      %v408 = vld [vmem:[%s1 + $0x668] sm:$0xff]
      %v409 = vld [vmem:[%s1 + $0x670] sm:$0xff]
      %v410 = vld [vmem:[%s1 + $0x678] sm:$0xff]
      %v411 = vld [vmem:[%s1 + $0x680] sm:$0xff]
      %v412 = vld [vmem:[%s1 + $0x688] sm:$0xff]
      %v413 = vld [vmem:[%s1 + $0x690] sm:$0xff]
      %v414 = vld [vmem:[%s1 + $0x698] sm:$0xff]
      %v415 = vld [vmem:[%s1 + $0x6a0] sm:$0xff]
      %v416 = vld [vmem:[%s1 + $0x6a8] sm:$0xff]
      %v417 = vld [vmem:[%s1 + $0x6b0] sm:$0xff]
      %v418 = vld [vmem:[%s1 + $0x6b8] sm:$0xff]
      %v419 = vld [vmem:[%s1 + $0x6c0] sm:$0xff]
      %v420 = vld [vmem:[%s1 + $0x6c8] sm:$0xff]
      %v421 = vld [vmem:[%s1 + $0x6d0] sm:$0xff]
      %v422 = vld [vmem:[%s1 + $0x6d8] sm:$0xff]
      %v423 = vld [vmem:[%s1 + $0x6e0] sm:$0xff]
      %v424 = vld [vmem:[%s1 + $0x6e8] sm:$0xff]
      %v425 = vld [vmem:[%s1 + $0x6f0] sm:$0xff]
      %v426 = vld [vmem:[%s1 + $0x6f8] sm:$0xff]
      %v427 = vld [vmem:[%s1 + $0x700] sm:$0xff]
      %v428 = vld [vmem:[%s1 + $0x708] sm:$0xff]
      %v429 = vld [vmem:[%s1 + $0x710] sm:$0xff]
      %v430 = vld [vmem:[%s1 + $0x718] sm:$0xff]
      %v431 = vld [vmem:[%s1 + $0x720] sm:$0xff]
      %v432 = vld [vmem:[%s1 + $0x728] sm:$0xff]
      %v433 = vld [vmem:[%s1 + $0x730] sm:$0xff]
      %v434 = vld [vmem:[%s1 + $0x738] sm:$0xff]
      %v435 = vld [vmem:[%s1 + $0x740] sm:$0xff]
      %v436 = vld [vmem:[%s1 + $0x748] sm:$0xff]
      %v437 = vld [vmem:[%s1 + $0x750] sm:$0xff]
      %v438 = vld [vmem:[%s1 + $0x758] sm:$0xff]
      %v439 = vld [vmem:[%s1 + $0x760] sm:$0xff]
      %v440 = vld [vmem:[%s1 + $0x768] sm:$0xff]
      %v441 = vld [vmem:[%s1 + $0x770] sm:$0xff]
      %v442 = vld [vmem:[%s1 + $0x778] sm:$0xff]
      %v443 = vld [vmem:[%s1 + $0x780] sm:$0xff]
      %v444 = vld [vmem:[%s1 + $0x788] sm:$0xff]
      %v445 = vld [vmem:[%s1 + $0x790] sm:$0xff]
      %v446 = vld [vmem:[%s1 + $0x798] sm:$0xff]
      %v447 = vld [vmem:[%s1 + $0x7a0] sm:$0xff]
      %v448 = vld [vmem:[%s1 + $0x7a8] sm:$0xff]
      %v449 = vld [vmem:[%s1 + $0x7b0] sm:$0xff]
      %v450 = vld [vmem:[%s1 + $0x7b8] sm:$0xff]
      %v451 = vld [vmem:[%s1 + $0x7c0] sm:$0xff]
      %v452 = vld [vmem:[%s1 + $0x7c8] sm:$0xff]
      %v453 = vld [vmem:[%s1 + $0x7d0] sm:$0xff]
      %v454 = vld [vmem:[%s1 + $0x7d8] sm:$0xff]
      %v455 = vld [vmem:[%s1 + $0x7e0] sm:$0xff]
      %v456 = vld [vmem:[%s1 + $0x7e8] sm:$0xff]
      %v457 = vld [vmem:[%s1 + $0x7f0] sm:$0xff]
      %v458 = vld [vmem:[%s1 + $0x7f8] sm:$0xff]
      %v459 = vld [vmem:[%s188] sm:$0xff]
      %v460 = vld [vmem:[%s188 + $0x8] sm:$0xff]
      %v461 = vld [vmem:[%s188 + $0x10] sm:$0xff]
      %v462 = vld [vmem:[%s188 + $0x18] sm:$0xff]
      %v463 = vld [vmem:[%s188 + $0x20] sm:$0xff]
      %v464 = vld [vmem:[%s188 + $0x28] sm:$0xff]
      %v465 = vld [vmem:[%s188 + $0x30] sm:$0xff]
      %v466 = vld [vmem:[%s188 + $0x38] sm:$0xff]
      %v467 = vld [vmem:[%s188 + $0x40] sm:$0xff]
      %v468 = vld [vmem:[%s188 + $0x48] sm:$0xff]
      %v469 = vld [vmem:[%s188 + $0x50] sm:$0xff]
      %v470 = vld [vmem:[%s188 + $0x58] sm:$0xff]
      %v471 = vld [vmem:[%s188 + $0x60] sm:$0xff]
      %v472 = vld [vmem:[%s188 + $0x68] sm:$0xff]
      %v473 = vld [vmem:[%s188 + $0x70] sm:$0xff]
      %v474 = vld [vmem:[%s188 + $0x78] sm:$0xff]
      %v475 = vld [vmem:[%s188 + $0x80] sm:$0xff]
      %v476 = vld [vmem:[%s188 + $0x88] sm:$0xff]
      %v477 = vld [vmem:[%s188 + $0x90] sm:$0xff]
      %v478 = vld [vmem:[%s188 + $0x98] sm:$0xff]
      %v479 = vld [vmem:[%s188 + $0xa0] sm:$0xff]
      %v480 = vld [vmem:[%s188 + $0xa8] sm:$0xff]
      %v481 = vld [vmem:[%s188 + $0xb0] sm:$0xff]
      %v482 = vld [vmem:[%s188 + $0xb8] sm:$0xff]
      %v483 = vld [vmem:[%s188 + $0xc0] sm:$0xff]
      %v484 = vld [vmem:[%s188 + $0xc8] sm:$0xff]
      %v485 = vld [vmem:[%s188 + $0xd0] sm:$0xff]
      %v486 = vld [vmem:[%s188 + $0xd8] sm:$0xff]
      %v487 = vld [vmem:[%s188 + $0xe0] sm:$0xff]
      %v488 = vld [vmem:[%s188 + $0xe8] sm:$0xff]
      %v489 = vld [vmem:[%s188 + $0xf0] sm:$0xff]
      %v490 = vld [vmem:[%s188 + $0xf8] sm:$0xff]
      %v491 = vld [vmem:[%s188 + $0x100] sm:$0xff]
      %v492 = vld [vmem:[%s188 + $0x108] sm:$0xff]
      %v493 = vld [vmem:[%s188 + $0x110] sm:$0xff]
      %v494 = vld [vmem:[%s188 + $0x118] sm:$0xff]
      %v495 = vld [vmem:[%s188 + $0x120] sm:$0xff]
      %v496 = vld [vmem:[%s188 + $0x128] sm:$0xff]
      %v497 = vld [vmem:[%s188 + $0x130] sm:$0xff]
      %v498 = vld [vmem:[%s188 + $0x138] sm:$0xff]
      %v499 = vld [vmem:[%s188 + $0x140] sm:$0xff]
      %v500 = vld [vmem:[%s188 + $0x148] sm:$0xff]
      %v501 = vld [vmem:[%s188 + $0x150] sm:$0xff]
      %v502 = vld [vmem:[%s188 + $0x158] sm:$0xff]
      %v503 = vld [vmem:[%s188 + $0x160] sm:$0xff]
      %v504 = vld [vmem:[%s188 + $0x168] sm:$0xff]
      %v505 = vld [vmem:[%s188 + $0x170] sm:$0xff]
      %v506 = vld [vmem:[%s188 + $0x178] sm:$0xff]
      %v507 = vld [vmem:[%s188 + $0x180] sm:$0xff]
      %v508 = vld [vmem:[%s188 + $0x188] sm:$0xff]
      %vm509 = vcmask 130048
      %v511 = vsel %vm509, %v206, 0
      %v514 = vsel %vm509, %v210, 0
      %v517 = vsel %vm509, %v214, 0
      %v520 = vsel %vm509, %v218, 0
      %v523 = vsel %vm509, %v222, 0
      %v526 = vsel %vm509, %v226, 0
      %v529 = vsel %vm509, %v230, 0
      %v532 = vsel %vm509, %v234, 0
      %v535 = vsel %vm509, %v238, 0
      %v538 = vsel %vm509, %v242, 0
      %v541 = vsel %vm509, %v246, 0
      %v544 = vsel %vm509, %v250, 0
      %v547 = vsel %vm509, %v254, 0
      %v550 = vsel %vm509, %v258, 0
      %v553 = vsel %vm509, %v262, 0
      %v556 = vsel %vm509, %v266, 0
      %v559 = vsel %vm509, %v270, 0
      %v562 = vsel %vm509, %v274, 0
      %v565 = vsel %vm509, %v278, 0
      %v568 = vsel %vm509, %v282, 0
      %v571 = vsel %vm509, %v286, 0
      %v574 = vsel %vm509, %v290, 0
      %v577 = vsel %vm509, %v294, 0
      %v580 = vsel %vm509, %v298, 0
      %v583 = vsel %vm509, %v302, 0
      %v586 = vsel %vm509, %v306, 0
      %v589 = vsel %vm509, %v310, 0
      %v592 = vsel %vm509, %v314, 0
      %v595 = vsel %vm509, %v318, 0
      %v598 = vsel %vm509, %v322, 0
      %v601 = vsel %vm509, %v326, 0
      %v604 = vsel %vm509, %v330, 0
      %v607 = vsel %vm509, %v334, 0
      %v610 = vsel %vm509, %v338, 0
      %v613 = vsel %vm509, %v342, 0
      %v616 = vsel %vm509, %v346, 0
      %v619 = vsel %vm509, %v350, 0
      %v622 = vsel %vm509, %v354, 0
      %v625 = vsel %vm509, %v358, 0
      %v628 = vsel %vm509, %v362, 0
      %v631 = vsel %vm509, %v366, 0
      %v634 = vsel %vm509, %v370, 0
      %v637 = vsel %vm509, %v374, 0
      %v640 = vsel %vm509, %v378, 0
      %v643 = vsel %vm509, %v382, 0
      %v646 = vsel %vm509, %v386, 0
      %v649 = vsel %vm509, %v390, 0
      %v652 = vsel %vm509, %v394, 0
      %v655 = vsel %vm509, %v398, 0
      %v658 = vsel %vm509, %v402, 0
      %v661 = vsel %vm509, %v406, 0
      %v664 = vsel %vm509, %v410, 0
      %v667 = vsel %vm509, %v414, 0
      %v670 = vsel %vm509, %v418, 0
      %v673 = vsel %vm509, %v422, 0
      %v676 = vsel %vm509, %v426, 0
      %v679 = vsel %vm509, %v430, 0
      %v682 = vsel %vm509, %v434, 0
      %v685 = vsel %vm509, %v438, 0
      %v688 = vsel %vm509, %v442, 0
      %v691 = vsel %vm509, %v446, 0
      %v694 = vsel %vm509, %v450, 0
      %v697 = vsel %vm509, %v454, 0
      %v700 = vsel %vm509, %v458, 0
      %702 = vmatprep.subr.mxu0 0.0
      %703 = vmatpush1.msra.mxu0 %v459
      %704 = vmatprep.subr.mxu0 0.0
      %705 = vmatpush1.msra.mxu0 %v460
      %706 = vmatprep.subr.mxu0 0.0
      %707 = vmatpush1.msra.mxu0 %v461
      %708 = vmatprep.subr.mxu0 0.0
      %709 = vmatpush1.msra.mxu0 %v462
      %710 = vmatprep.subr.mxu0 0.0
      %711 = vmatpush1.msra.mxu0 %v463
      %712 = vmatprep.subr.mxu0 0.0
      %713 = vmatpush1.msra.mxu0 %v464
      %714 = vmatprep.subr.mxu0 0.0
      %715 = vmatpush1.msra.mxu0 %v465
      %716 = vmatprep.subr.mxu0 0.0
      %717 = vmatpush1.msra.mxu0 %v466
      %718 = vmatprep.subr.mxu0 0.0
      %719 = vmatpush1.msra.mxu0 %v467
      %720 = vmatprep.subr.mxu0 0.0
      %721 = vmatpush1.msra.mxu0 %v468
      %722 = vmatprep.subr.mxu0 0.0
      %723 = vmatpush1.msra.mxu0 %v469
      %724 = vmatprep.subr.mxu0 0.0
      %725 = vmatpush1.msra.mxu0 %v470
      %726 = vmatprep.subr.mxu0 0.0
      %727 = vmatpush1.msra.mxu0 %v471
      %728 = vmatprep.subr.mxu0 0.0
      %729 = vmatpush1.msra.mxu0 %v472
      %730 = vmatprep.subr.mxu0 0.0
      %731 = vmatpush1.msra.mxu0 %v473
      %732 = vmatprep.subr.mxu0 0.0
      %733 = vmatpush1.msra.mxu0 %v474
      %734 = vmatprep.subr.mxu0 0.0
      %735 = vmatpush1.msra.mxu0 %v475
      %736 = vmatprep.subr.mxu0 0.0
      %737 = vmatpush1.msra.mxu0 %v476
      %738 = vmatprep.subr.mxu0 0.0
      %739 = vmatpush1.msra.mxu0 %v477
      %740 = vmatprep.subr.mxu0 0.0
      %741 = vmatpush1.msra.mxu0 %v478
      %742 = vmatprep.subr.mxu0 0.0
      %743 = vmatpush1.msra.mxu0 %v479
      %744 = vmatprep.subr.mxu0 0.0
      %745 = vmatpush1.msra.mxu0 %v480
      %746 = vmatprep.subr.mxu0 0.0
      %747 = vmatpush1.msra.mxu0 %v481
      %748 = vmatprep.subr.mxu0 0.0
      %749 = vmatpush1.msra.mxu0 %v482
      %750 = vmatprep.subr.mxu0 0.0
      %751 = vmatpush1.msra.mxu0 %v483
      %752 = vmatprep.subr.mxu0 0.0
      %753 = vmatpush1.msra.mxu0 %v484
      %754 = vmatprep.subr.mxu0 0.0
      %755 = vmatpush1.msra.mxu0 %v485
      %756 = vmatprep.subr.mxu0 0.0
      %757 = vmatpush1.msra.mxu0 %v486
      %758 = vmatprep.subr.mxu0 0.0
      %759 = vmatpush1.msra.mxu0 %v487
      %760 = vmatprep.subr.mxu0 0.0
      %761 = vmatpush1.msra.mxu0 %v488
      %762 = vmatprep.subr.mxu0 0.0
      %763 = vmatpush1.msra.mxu0 %v489
      %764 = vmatprep.subr.mxu0 0.0
      %765 = vmatpush1.msra.mxu0 %v490
      %766 = vmatprep.mubr.f32.mxu0 %v204
      %767 = vmatmul.mubr.f32.gmra.mrb[0].mxu0 %v203
      %v768 = vpop.f32.mrb[0].mxu0
      %v769 = vadd.f32 0.0, %v768
      %v770 = vpop.f32.mrb[0].mxu0
      %771 = vmatprep.mubr.f32.mxu0 %v208
      %772 = vmatmul.mubr.f32.gmra.mrb[0].mxu0 %v207
      %v773 = vpop.f32.mrb[0].mxu0
      %v774 = vadd.f32 0.0, %v773
      %v775 = vpop.f32.mrb[0].mxu0
      %776 = vmatprep.mubr.f32.mxu0 %v212
      %777 = vmatmul.mubr.f32.gmra.mrb[0].mxu0 %v211
      %v778 = vpop.f32.mrb[0].mxu0
      %v779 = vadd.f32 0.0, %v778
      %v780 = vpop.f32.mrb[0].mxu0
      %781 = vmatprep.mubr.f32.mxu0 %v216
      %782 = vmatmul.mubr.f32.gmra.mrb[0].mxu0 %v215
      %v783 = vpop.f32.mrb[0].mxu0
      %v784 = vadd.f32 0.0, %v783
      %v785 = vpop.f32.mrb[0].mxu0
      %786 = vmatprep.mubr.f32.mxu0 %v220
      %787 = vmatmul.mubr.f32.gmra.mrb[0].mxu0 %v219
      %v788 = vpop.f32.mrb[0].mxu0
      %v789 = vadd.f32 0.0, %v788
      %v790 = vpop.f32.mrb[0].mxu0
      %791 = vmatprep.mubr.f32.mxu0 %v224
      %792 = vmatmul.mubr.f32.gmra.mrb[0].mxu0 %v223
      %v793 = vpop.f32.mrb[0].mxu0
      %v794 = vadd.f32 0.0, %v793
      %v795 = vpop.f32.mrb[0].mxu0
      %796 = vmatprep.mubr.f32.mxu0 %v228
      %797 = vmatmul.mubr.f32.gmra.mrb[0].mxu0 %v227
      %v798 = vpop.f32.mrb[0].mxu0
      %v799 = vadd.f32 0.0, %v798
      %v800 = vpop.f32.mrb[0].mxu0
      %801 = vmatprep.mubr.f32.mxu0 %v232
      %802 = vmatmul.mubr.f32.gmra.mrb[0].mxu0 %v231
      %v803 = vpop.f32.mrb[0].mxu0
      %v804 = vadd.f32 0.0, %v803
      %v805 = vpop.f32.mrb[0].mxu0
      %806 = vmatprep.mubr.f32.mxu0 %v236
      %807 = vmatmul.mubr.f32.gmra.mrb[0].mxu0 %v235
      %v808 = vpop.f32.mrb[0].mxu0
      %v809 = vadd.f32 0.0, %v808
      %v810 = vpop.f32.mrb[0].mxu0
      %811 = vmatprep.mubr.f32.mxu0 %v240
      %812 = vmatmul.mubr.f32.gmra.mrb[0].mxu0 %v239
      %v813 = vpop.f32.mrb[0].mxu0
      %v814 = vadd.f32 0.0, %v813
      %v815 = vpop.f32.mrb[0].mxu0
      %816 = vmatprep.mubr.f32.mxu0 %v244
      %817 = vmatmul.mubr.f32.gmra.mrb[0].mxu0 %v243
      %v818 = vpop.f32.mrb[0].mxu0
      %v819 = vadd.f32 0.0, %v818
      %v820 = vpop.f32.mrb[0].mxu0
      %821 = vmatprep.mubr.f32.mxu0 %v248
      %822 = vmatmul.mubr.f32.gmra.mrb[0].mxu0 %v247
      %v823 = vpop.f32.mrb[0].mxu0
      %v824 = vadd.f32 0.0, %v823
      %v825 = vpop.f32.mrb[0].mxu0
      %826 = vmatprep.mubr.f32.mxu0 %v252
      %827 = vmatmul.mubr.f32.gmra.mrb[0].mxu0 %v251
      %v828 = vpop.f32.mrb[0].mxu0
      %v829 = vadd.f32 0.0, %v828
      %v830 = vpop.f32.mrb[0].mxu0
      %831 = vmatprep.mubr.f32.mxu0 %v256
      %832 = vmatmul.mubr.f32.gmra.mrb[0].mxu0 %v255
      %v833 = vpop.f32.mrb[0].mxu0
      %v834 = vadd.f32 0.0, %v833
      %v835 = vpop.f32.mrb[0].mxu0
      %836 = vmatprep.mubr.f32.mxu0 %v260
      %837 = vmatmul.mubr.f32.gmra.mrb[0].mxu0 %v259
      %v838 = vpop.f32.mrb[0].mxu0
      %v839 = vadd.f32 0.0, %v838
      %v840 = vpop.f32.mrb[0].mxu0
      %841 = vmatprep.mubr.f32.mxu0 %v264
      %842 = vmatmul.mubr.f32.gmra.mrb[0].mxu0 %v263
      %v843 = vpop.f32.mrb[0].mxu0
      %v844 = vadd.f32 0.0, %v843
      %v845 = vpop.f32.mrb[0].mxu0
      %846 = vmatprep.mubr.f32.mxu0 %v268
      %847 = vmatmul.mubr.f32.gmra.mrb[0].mxu0 %v267
      %v848 = vpop.f32.mrb[0].mxu0
      %v849 = vadd.f32 0.0, %v848
      %v850 = vpop.f32.mrb[0].mxu0
      %851 = vmatprep.mubr.f32.mxu0 %v272
      %852 = vmatmul.mubr.f32.gmra.mrb[0].mxu0 %v271
      %v853 = vpop.f32.mrb[0].mxu0
      %v854 = vadd.f32 0.0, %v853
      %v855 = vpop.f32.mrb[0].mxu0
      %856 = vmatprep.mubr.f32.mxu0 %v276
      %857 = vmatmul.mubr.f32.gmra.mrb[0].mxu0 %v275
      %v858 = vpop.f32.mrb[0].mxu0
      %v859 = vadd.f32 0.0, %v858
      %v860 = vpop.f32.mrb[0].mxu0
      %861 = vmatprep.mubr.f32.mxu0 %v280
      %862 = vmatmul.mubr.f32.gmra.mrb[0].mxu0 %v279
      %v863 = vpop.f32.mrb[0].mxu0
      %v864 = vadd.f32 0.0, %v863
      %v865 = vpop.f32.mrb[0].mxu0
      %866 = vmatprep.mubr.f32.mxu0 %v284
      %867 = vmatmul.mubr.f32.gmra.mrb[0].mxu0 %v283
      %v868 = vpop.f32.mrb[0].mxu0
      %v869 = vadd.f32 0.0, %v868
      %v870 = vpop.f32.mrb[0].mxu0
      %871 = vmatprep.mubr.f32.mxu0 %v288
      %872 = vmatmul.mubr.f32.gmra.mrb[0].mxu0 %v287
      %v873 = vpop.f32.mrb[0].mxu0
      %v874 = vadd.f32 0.0, %v873
      %v875 = vpop.f32.mrb[0].mxu0
      %876 = vmatprep.mubr.f32.mxu0 %v292
      %877 = vmatmul.mubr.f32.gmra.mrb[0].mxu0 %v291
      %v878 = vpop.f32.mrb[0].mxu0
      %v879 = vadd.f32 0.0, %v878
      %v880 = vpop.f32.mrb[0].mxu0
      %881 = vmatprep.mubr.f32.mxu0 %v296
      %882 = vmatmul.mubr.f32.gmra.mrb[0].mxu0 %v295
      %v883 = vpop.f32.mrb[0].mxu0
      %v884 = vadd.f32 0.0, %v883
      %v885 = vpop.f32.mrb[0].mxu0
      %886 = vmatprep.mubr.f32.mxu0 %v300
      %887 = vmatmul.mubr.f32.gmra.mrb[0].mxu0 %v299
      %v888 = vpop.f32.mrb[0].mxu0
      %v889 = vadd.f32 0.0, %v888
      %v890 = vpop.f32.mrb[0].mxu0
      %891 = vmatprep.mubr.f32.mxu0 %v304
      %892 = vmatmul.mubr.f32.gmra.mrb[0].mxu0 %v303
      %v893 = vpop.f32.mrb[0].mxu0
      %v894 = vadd.f32 0.0, %v893
      %v895 = vpop.f32.mrb[0].mxu0
      %896 = vmatprep.mubr.f32.mxu0 %v308
      %897 = vmatmul.mubr.f32.gmra.mrb[0].mxu0 %v307
      %v898 = vpop.f32.mrb[0].mxu0
      %v899 = vadd.f32 0.0, %v898
      %v900 = vpop.f32.mrb[0].mxu0
      %901 = vmatprep.mubr.f32.mxu0 %v312
      %902 = vmatmul.mubr.f32.gmra.mrb[0].mxu0 %v311
      %v903 = vpop.f32.mrb[0].mxu0
      %v904 = vadd.f32 0.0, %v903
      %v905 = vpop.f32.mrb[0].mxu0
      %906 = vmatprep.mubr.f32.mxu0 %v316
      %907 = vmatmul.mubr.f32.gmra.mrb[0].mxu0 %v315
      %v908 = vpop.f32.mrb[0].mxu0
      %v909 = vadd.f32 0.0, %v908
      %v910 = vpop.f32.mrb[0].mxu0
      %911 = vmatprep.mubr.f32.mxu0 %v320
      %912 = vmatmul.mubr.f32.gmra.mrb[0].mxu0 %v319
      %v913 = vpop.f32.mrb[0].mxu0
      %v914 = vadd.f32 0.0, %v913
      %v915 = vpop.f32.mrb[0].mxu0
      %916 = vmatprep.mubr.f32.mxu0 %v324
      %917 = vmatmul.mubr.f32.gmra.mrb[0].mxu0 %v323
      %v918 = vpop.f32.mrb[0].mxu0
      %v919 = vadd.f32 0.0, %v918
      %v920 = vpop.f32.mrb[0].mxu0
      %921 = vmatprep.mubr.f32.mxu0 %v328
      %922 = vmatmul.mubr.f32.gmra.mrb[0].mxu0 %v327
      %v923 = vpop.f32.mrb[0].mxu0
      %v924 = vadd.f32 0.0, %v923
      %v925 = vpop.f32.mrb[0].mxu0
      %926 = vmatprep.mubr.f32.mxu0 %v332
      %927 = vmatmul.mubr.f32.gmra.mrb[0].mxu0 %v331
      %v928 = vpop.f32.mrb[0].mxu0
      %v929 = vadd.f32 0.0, %v928
      %v930 = vpop.f32.mrb[0].mxu0
      %931 = vmatprep.mubr.f32.mxu0 %v336
      %932 = vmatmul.mubr.f32.gmra.mrb[0].mxu0 %v335
      %v933 = vpop.f32.mrb[0].mxu0
      %v934 = vadd.f32 0.0, %v933
      %v935 = vpop.f32.mrb[0].mxu0
      %936 = vmatprep.mubr.f32.mxu0 %v340
      %937 = vmatmul.mubr.f32.gmra.mrb[0].mxu0 %v339
      %v938 = vpop.f32.mrb[0].mxu0
      %v939 = vadd.f32 0.0, %v938
      %v940 = vpop.f32.mrb[0].mxu0
      %941 = vmatprep.mubr.f32.mxu0 %v344
      %942 = vmatmul.mubr.f32.gmra.mrb[0].mxu0 %v343
      %v943 = vpop.f32.mrb[0].mxu0
      %v944 = vadd.f32 0.0, %v943
      %v945 = vpop.f32.mrb[0].mxu0
      %946 = vmatprep.mubr.f32.mxu0 %v348
      %947 = vmatmul.mubr.f32.gmra.mrb[0].mxu0 %v347
      %v948 = vpop.f32.mrb[0].mxu0
      %v949 = vadd.f32 0.0, %v948
      %v950 = vpop.f32.mrb[0].mxu0
      %951 = vmatprep.mubr.f32.mxu0 %v352
      %952 = vmatmul.mubr.f32.gmra.mrb[0].mxu0 %v351
      %v953 = vpop.f32.mrb[0].mxu0
      %v954 = vadd.f32 0.0, %v953
      %v955 = vpop.f32.mrb[0].mxu0
      %956 = vmatprep.mubr.f32.mxu0 %v356
      %957 = vmatmul.mubr.f32.gmra.mrb[0].mxu0 %v355
      %v958 = vpop.f32.mrb[0].mxu0
      %v959 = vadd.f32 0.0, %v958
      %v960 = vpop.f32.mrb[0].mxu0
      %961 = vmatprep.mubr.f32.mxu0 %v360
      %962 = vmatmul.mubr.f32.gmra.mrb[0].mxu0 %v359
      %v963 = vpop.f32.mrb[0].mxu0
      %v964 = vadd.f32 0.0, %v963
      %v965 = vpop.f32.mrb[0].mxu0
      %966 = vmatprep.mubr.f32.mxu0 %v364
      %967 = vmatmul.mubr.f32.gmra.mrb[0].mxu0 %v363
      %v968 = vpop.f32.mrb[0].mxu0
      %v969 = vadd.f32 0.0, %v968
      %v970 = vpop.f32.mrb[0].mxu0
      %971 = vmatprep.mubr.f32.mxu0 %v368
      %972 = vmatmul.mubr.f32.gmra.mrb[0].mxu0 %v367
      %v973 = vpop.f32.mrb[0].mxu0
      %v974 = vadd.f32 0.0, %v973
      %v975 = vpop.f32.mrb[0].mxu0
      %976 = vmatprep.mubr.f32.mxu0 %v372
      %977 = vmatmul.mubr.f32.gmra.mrb[0].mxu0 %v371
      %v978 = vpop.f32.mrb[0].mxu0
      %v979 = vadd.f32 0.0, %v978
      %v980 = vpop.f32.mrb[0].mxu0
      %981 = vmatprep.mubr.f32.mxu0 %v376
      %982 = vmatmul.mubr.f32.gmra.mrb[0].mxu0 %v375
      %v983 = vpop.f32.mrb[0].mxu0
      %v984 = vadd.f32 0.0, %v983
      %v985 = vpop.f32.mrb[0].mxu0
      %986 = vmatprep.mubr.f32.mxu0 %v380
      %987 = vmatmul.mubr.f32.gmra.mrb[0].mxu0 %v379
      %v988 = vpop.f32.mrb[0].mxu0
      %v989 = vadd.f32 0.0, %v988
      %v990 = vpop.f32.mrb[0].mxu0
      %991 = vmatprep.mubr.f32.mxu0 %v384
      %992 = vmatmul.mubr.f32.gmra.mrb[0].mxu0 %v383
      %v993 = vpop.f32.mrb[0].mxu0
      %v994 = vadd.f32 0.0, %v993
      %v995 = vpop.f32.mrb[0].mxu0
      %996 = vmatprep.mubr.f32.mxu0 %v388
      %997 = vmatmul.mubr.f32.gmra.mrb[0].mxu0 %v387
      %v998 = vpop.f32.mrb[0].mxu0
      %v999 = vadd.f32 0.0, %v998
      %v1000 = vpop.f32.mrb[0].mxu0
      %1001 = vmatprep.mubr.f32.mxu0 %v392
      %1002 = vmatmul.mubr.f32.gmra.mrb[0].mxu0 %v391
      %v1003 = vpop.f32.mrb[0].mxu0
      %v1004 = vadd.f32 0.0, %v1003
      %v1005 = vpop.f32.mrb[0].mxu0
      %1006 = vmatprep.mubr.f32.mxu0 %v396
      %1007 = vmatmul.mubr.f32.gmra.mrb[0].mxu0 %v395
      %v1008 = vpop.f32.mrb[0].mxu0
      %v1009 = vadd.f32 0.0, %v1008
      %v1010 = vpop.f32.mrb[0].mxu0
      %1011 = vmatprep.mubr.f32.mxu0 %v400
      %1012 = vmatmul.mubr.f32.gmra.mrb[0].mxu0 %v399
      %v1013 = vpop.f32.mrb[0].mxu0
      %v1014 = vadd.f32 0.0, %v1013
      %v1015 = vpop.f32.mrb[0].mxu0
      %1016 = vmatprep.mubr.f32.mxu0 %v404
      %1017 = vmatmul.mubr.f32.gmra.mrb[0].mxu0 %v403
      %v1018 = vpop.f32.mrb[0].mxu0
      %v1019 = vadd.f32 0.0, %v1018
      %v1020 = vpop.f32.mrb[0].mxu0
      %1021 = vmatprep.mubr.f32.mxu0 %v408
      %1022 = vmatmul.mubr.f32.gmra.mrb[0].mxu0 %v407
      %v1023 = vpop.f32.mrb[0].mxu0
      %v1024 = vadd.f32 0.0, %v1023
      %v1025 = vpop.f32.mrb[0].mxu0
      %1026 = vmatprep.mubr.f32.mxu0 %v412
      %1027 = vmatmul.mubr.f32.gmra.mrb[0].mxu0 %v411
      %v1028 = vpop.f32.mrb[0].mxu0
      %v1029 = vadd.f32 0.0, %v1028
      %v1030 = vpop.f32.mrb[0].mxu0
      %1031 = vmatprep.mubr.f32.mxu0 %v416
      %1032 = vmatmul.mubr.f32.gmra.mrb[0].mxu0 %v415
      %v1033 = vpop.f32.mrb[0].mxu0
      %v1034 = vadd.f32 0.0, %v1033
      %v1035 = vpop.f32.mrb[0].mxu0
      %1036 = vmatprep.mubr.f32.mxu0 %v420
      %1037 = vmatmul.mubr.f32.gmra.mrb[0].mxu0 %v419
      %v1038 = vpop.f32.mrb[0].mxu0
      %v1039 = vadd.f32 0.0, %v1038
      %v1040 = vpop.f32.mrb[0].mxu0
      %1041 = vmatprep.mubr.f32.mxu0 %v424
      %1042 = vmatmul.mubr.f32.gmra.mrb[0].mxu0 %v423
      %v1043 = vpop.f32.mrb[0].mxu0
      %v1044 = vadd.f32 0.0, %v1043
      %v1045 = vpop.f32.mrb[0].mxu0
      %1046 = vmatprep.mubr.f32.mxu0 %v428
      %1047 = vmatmul.mubr.f32.gmra.mrb[0].mxu0 %v427
      %v1048 = vpop.f32.mrb[0].mxu0
      %v1049 = vadd.f32 0.0, %v1048
      %v1050 = vpop.f32.mrb[0].mxu0
      %1051 = vmatprep.mubr.f32.mxu0 %v432
      %1052 = vmatmul.mubr.f32.gmra.mrb[0].mxu0 %v431
      %v1053 = vpop.f32.mrb[0].mxu0
      %v1054 = vadd.f32 0.0, %v1053
      %v1055 = vpop.f32.mrb[0].mxu0
      %1056 = vmatprep.mubr.f32.mxu0 %v436
      %1057 = vmatmul.mubr.f32.gmra.mrb[0].mxu0 %v435
      %v1058 = vpop.f32.mrb[0].mxu0
      %v1059 = vadd.f32 0.0, %v1058
      %v1060 = vpop.f32.mrb[0].mxu0
      %1061 = vmatprep.mubr.f32.mxu0 %v440
      %1062 = vmatmul.mubr.f32.gmra.mrb[0].mxu0 %v439
      %v1063 = vpop.f32.mrb[0].mxu0
      %v1064 = vadd.f32 0.0, %v1063
      %v1065 = vpop.f32.mrb[0].mxu0
      %1066 = vmatprep.mubr.f32.mxu0 %v444
      %1067 = vmatmul.mubr.f32.gmra.mrb[0].mxu0 %v443
      %v1068 = vpop.f32.mrb[0].mxu0
      %v1069 = vadd.f32 0.0, %v1068
      %v1070 = vpop.f32.mrb[0].mxu0
      %1071 = vmatprep.mubr.f32.mxu0 %v448
      %1072 = vmatmul.mubr.f32.gmra.mrb[0].mxu0 %v447
      %v1073 = vpop.f32.mrb[0].mxu0
      %v1074 = vadd.f32 0.0, %v1073
      %v1075 = vpop.f32.mrb[0].mxu0
      %1076 = vmatprep.mubr.f32.mxu0 %v452
      %1077 = vmatmul.mubr.f32.gmra.mrb[0].mxu0 %v451
      %v1078 = vpop.f32.mrb[0].mxu0
      %v1079 = vadd.f32 0.0, %v1078
      %v1080 = vpop.f32.mrb[0].mxu0
      %1081 = vmatprep.mubr.f32.mxu0 %v456
      %1082 = vmatmul.mubr.f32.gmra.mrb[0].mxu0 %v455
      %v1083 = vpop.f32.mrb[0].mxu0
      %v1084 = vadd.f32 0.0, %v1083
      %v1085 = vpop.f32.mrb[0].mxu0
      %1086 = vdwg.mxu0
      %1087 = vmatprep.subr.mxu0 0.0
      %1088 = vmatpush1.msra.mxu0 %v491
      %1089 = vmatprep.subr.mxu0 0.0
      %1090 = vmatpush1.msra.mxu0 %v492
      %1091 = vmatprep.subr.mxu0 0.0
      %1092 = vmatpush1.msra.mxu0 %v493
      %1093 = vmatprep.subr.mxu0 0.0
      %1094 = vmatpush1.msra.mxu0 %v494
      %1095 = vmatprep.subr.mxu0 0.0
      %1096 = vmatpush1.msra.mxu0 %v495
      %1097 = vmatprep.subr.mxu0 0.0
      %1098 = vmatpush1.msra.mxu0 %v496
      %1099 = vmatprep.subr.mxu0 0.0
      %1100 = vmatpush1.msra.mxu0 %v497
      %1101 = vmatprep.subr.mxu0 0.0
      %1102 = vmatpush1.msra.mxu0 %v498
      %1103 = vmatprep.subr.mxu0 0.0
      %1104 = vmatpush1.msra.mxu0 %v499
      %1105 = vmatprep.subr.mxu0 0.0
      %1106 = vmatpush1.msra.mxu0 %v500
      %1107 = vmatprep.subr.mxu0 0.0
      %1108 = vmatpush1.msra.mxu0 %v501
      %1109 = vmatprep.subr.mxu0 0.0
      %1110 = vmatpush1.msra.mxu0 %v502
      %1111 = vmatprep.subr.mxu0 0.0
      %1112 = vmatpush1.msra.mxu0 %v503
      %1113 = vmatprep.subr.mxu0 0.0
      %1114 = vmatpush1.msra.mxu0 %v504
      %1115 = vmatprep.subr.mxu0 0.0
      %1116 = vmatpush1.msra.mxu0 %v505
      %1117 = vmatprep.subr.mxu0 0.0
      %1118 = vmatpush1.msra.mxu0 %v506
      %1119 = vmatprep.subr.mxu0 0.0
      %1120 = vmatpush1.msra.mxu0 %v507
      %1121 = vmatprep.subr.mxu0 0.0
      %1122 = vmatpush1.msra.mxu0 %v508
      %1123 = vmatprep.subr.mxu0 0.0
      %1124 = vmatpush1.msra.mxu0 0.0
      %1125 = vmatprep.subr.mxu0 0.0
      %1126 = vmatpush1.msra.mxu0 0.0
      %1127 = vmatprep.subr.mxu0 0.0
      %1128 = vmatpush1.msra.mxu0 0.0
      %1129 = vmatprep.subr.mxu0 0.0
      %1130 = vmatpush1.msra.mxu0 0.0
      %1131 = vmatprep.subr.mxu0 0.0
      %1132 = vmatpush1.msra.mxu0 0.0
      %1133 = vmatprep.subr.mxu0 0.0
      %1134 = vmatpush1.msra.mxu0 0.0
      %1135 = vmatprep.subr.mxu0 0.0
      %1136 = vmatpush1.msra.mxu0 0.0
      %1137 = vmatprep.subr.mxu0 0.0
      %1138 = vmatpush1.msra.mxu0 0.0
      %1139 = vmatprep.subr.mxu0 0.0
      %1140 = vmatpush1.msra.mxu0 0.0
      %1141 = vmatprep.subr.mxu0 0.0
      %1142 = vmatpush1.msra.mxu0 0.0
      %1143 = vmatprep.subr.mxu0 0.0
      %1144 = vmatpush1.msra.mxu0 0.0
      %1145 = vmatprep.subr.mxu0 0.0
      %1146 = vmatpush1.msra.mxu0 0.0
      %1147 = vmatprep.subr.mxu0 0.0
      %1148 = vmatpush1.msra.mxu0 0.0
      %1149 = vmatprep.subr.mxu0 0.0
      %1150 = vmatpush1.msra.mxu0 0.0
      %1151 = vmatprep.mubr.f32.mxu0 %v511
      %1152 = vmatmul.mubr.f32.gmra.mrb[0].mxu0 %v205
      %v1153 = vpop.f32.mrb[0].mxu0
      %v1154 = vadd.f32 %v769, %v1153
      %v1155 = vpop.f32.mrb[0].mxu0
      %1156 = vmatprep.mubr.f32.mxu0 %v514
      %1157 = vmatmul.mubr.f32.gmra.mrb[0].mxu0 %v209
      %v1158 = vpop.f32.mrb[0].mxu0
      %v1159 = vadd.f32 %v774, %v1158
      %v1160 = vpop.f32.mrb[0].mxu0
      %1161 = vmatprep.mubr.f32.mxu0 %v517
      %1162 = vmatmul.mubr.f32.gmra.mrb[0].mxu0 %v213
      %v1163 = vpop.f32.mrb[0].mxu0
      %v1164 = vadd.f32 %v779, %v1163
      %v1165 = vpop.f32.mrb[0].mxu0
      %1166 = vmatprep.mubr.f32.mxu0 %v520
      %1167 = vmatmul.mubr.f32.gmra.mrb[0].mxu0 %v217
      %v1168 = vpop.f32.mrb[0].mxu0
      %v1169 = vadd.f32 %v784, %v1168
      %v1170 = vpop.f32.mrb[0].mxu0
      %1171 = vmatprep.mubr.f32.mxu0 %v523
      %1172 = vmatmul.mubr.f32.gmra.mrb[0].mxu0 %v221
      %v1173 = vpop.f32.mrb[0].mxu0
      %v1174 = vadd.f32 %v789, %v1173
      %v1175 = vpop.f32.mrb[0].mxu0
      %1176 = vmatprep.mubr.f32.mxu0 %v526
      %1177 = vmatmul.mubr.f32.gmra.mrb[0].mxu0 %v225
      %v1178 = vpop.f32.mrb[0].mxu0
      %v1179 = vadd.f32 %v794, %v1178
      %v1180 = vpop.f32.mrb[0].mxu0
      %1181 = vmatprep.mubr.f32.mxu0 %v529
      %1182 = vmatmul.mubr.f32.gmra.mrb[0].mxu0 %v229
      %v1183 = vpop.f32.mrb[0].mxu0
      %v1184 = vadd.f32 %v799, %v1183
      %v1185 = vpop.f32.mrb[0].mxu0
      %1186 = vmatprep.mubr.f32.mxu0 %v532
      %1187 = vmatmul.mubr.f32.gmra.mrb[0].mxu0 %v233
      %v1188 = vpop.f32.mrb[0].mxu0
      %v1189 = vadd.f32 %v804, %v1188
      %v1190 = vpop.f32.mrb[0].mxu0
      %1191 = vmatprep.mubr.f32.mxu0 %v535
      %1192 = vmatmul.mubr.f32.gmra.mrb[0].mxu0 %v237
      %v1193 = vpop.f32.mrb[0].mxu0
      %v1194 = vadd.f32 %v809, %v1193
      %v1195 = vpop.f32.mrb[0].mxu0
      %1196 = vmatprep.mubr.f32.mxu0 %v538
      %1197 = vmatmul.mubr.f32.gmra.mrb[0].mxu0 %v241
      %v1198 = vpop.f32.mrb[0].mxu0
      %v1199 = vadd.f32 %v814, %v1198
      %v1200 = vpop.f32.mrb[0].mxu0
      %1201 = vmatprep.mubr.f32.mxu0 %v541
      %1202 = vmatmul.mubr.f32.gmra.mrb[0].mxu0 %v245
      %v1203 = vpop.f32.mrb[0].mxu0
      %v1204 = vadd.f32 %v819, %v1203
      %v1205 = vpop.f32.mrb[0].mxu0
      %1206 = vmatprep.mubr.f32.mxu0 %v544
      %1207 = vmatmul.mubr.f32.gmra.mrb[0].mxu0 %v249
      %v1208 = vpop.f32.mrb[0].mxu0
      %v1209 = vadd.f32 %v824, %v1208
      %v1210 = vpop.f32.mrb[0].mxu0
      %1211 = vmatprep.mubr.f32.mxu0 %v547
      %1212 = vmatmul.mubr.f32.gmra.mrb[0].mxu0 %v253
      %v1213 = vpop.f32.mrb[0].mxu0
      %v1214 = vadd.f32 %v829, %v1213
      %v1215 = vpop.f32.mrb[0].mxu0
      %1216 = vmatprep.mubr.f32.mxu0 %v550
      %1217 = vmatmul.mubr.f32.gmra.mrb[0].mxu0 %v257
      %v1218 = vpop.f32.mrb[0].mxu0
      %v1219 = vadd.f32 %v834, %v1218
      %v1220 = vpop.f32.mrb[0].mxu0
      %1221 = vmatprep.mubr.f32.mxu0 %v553
      %1222 = vmatmul.mubr.f32.gmra.mrb[0].mxu0 %v261
      %v1223 = vpop.f32.mrb[0].mxu0
      %v1224 = vadd.f32 %v839, %v1223
      %v1225 = vpop.f32.mrb[0].mxu0
      %1226 = vmatprep.mubr.f32.mxu0 %v556
      %1227 = vmatmul.mubr.f32.gmra.mrb[0].mxu0 %v265
      %v1228 = vpop.f32.mrb[0].mxu0
      %v1229 = vadd.f32 %v844, %v1228
      %v1230 = vpop.f32.mrb[0].mxu0
      %1231 = vmatprep.mubr.f32.mxu0 %v559
      %1232 = vmatmul.mubr.f32.gmra.mrb[0].mxu0 %v269
      %v1233 = vpop.f32.mrb[0].mxu0
      %v1234 = vadd.f32 %v849, %v1233
      %v1235 = vpop.f32.mrb[0].mxu0
      %1236 = vmatprep.mubr.f32.mxu0 %v562
      %1237 = vmatmul.mubr.f32.gmra.mrb[0].mxu0 %v273
      %v1238 = vpop.f32.mrb[0].mxu0
      %v1239 = vadd.f32 %v854, %v1238
      %v1240 = vpop.f32.mrb[0].mxu0
      %1241 = vmatprep.mubr.f32.mxu0 %v565
      %1242 = vmatmul.mubr.f32.gmra.mrb[0].mxu0 %v277
      %v1243 = vpop.f32.mrb[0].mxu0
      %v1244 = vadd.f32 %v859, %v1243
      %v1245 = vpop.f32.mrb[0].mxu0
      %1246 = vmatprep.mubr.f32.mxu0 %v568
      %1247 = vmatmul.mubr.f32.gmra.mrb[0].mxu0 %v281
      %v1248 = vpop.f32.mrb[0].mxu0
      %v1249 = vadd.f32 %v864, %v1248
      %v1250 = vpop.f32.mrb[0].mxu0
      %1251 = vmatprep.mubr.f32.mxu0 %v571
      %1252 = vmatmul.mubr.f32.gmra.mrb[0].mxu0 %v285
      %v1253 = vpop.f32.mrb[0].mxu0
      %v1254 = vadd.f32 %v869, %v1253
      %v1255 = vpop.f32.mrb[0].mxu0
      %1256 = vmatprep.mubr.f32.mxu0 %v574
      %1257 = vmatmul.mubr.f32.gmra.mrb[0].mxu0 %v289
      %v1258 = vpop.f32.mrb[0].mxu0
      %v1259 = vadd.f32 %v874, %v1258
      %v1260 = vpop.f32.mrb[0].mxu0
      %1261 = vmatprep.mubr.f32.mxu0 %v577
      %1262 = vmatmul.mubr.f32.gmra.mrb[0].mxu0 %v293
      %v1263 = vpop.f32.mrb[0].mxu0
      %v1264 = vadd.f32 %v879, %v1263
      %v1265 = vpop.f32.mrb[0].mxu0
      %1266 = vmatprep.mubr.f32.mxu0 %v580
      %1267 = vmatmul.mubr.f32.gmra.mrb[0].mxu0 %v297
      %v1268 = vpop.f32.mrb[0].mxu0
      %v1269 = vadd.f32 %v884, %v1268
      %v1270 = vpop.f32.mrb[0].mxu0
      %1271 = vmatprep.mubr.f32.mxu0 %v583
      %1272 = vmatmul.mubr.f32.gmra.mrb[0].mxu0 %v301
      %v1273 = vpop.f32.mrb[0].mxu0
      %v1274 = vadd.f32 %v889, %v1273
      %v1275 = vpop.f32.mrb[0].mxu0
      %1276 = vmatprep.mubr.f32.mxu0 %v586
      %1277 = vmatmul.mubr.f32.gmra.mrb[0].mxu0 %v305
      %v1278 = vpop.f32.mrb[0].mxu0
      %v1279 = vadd.f32 %v894, %v1278
      %v1280 = vpop.f32.mrb[0].mxu0
      %1281 = vmatprep.mubr.f32.mxu0 %v589
      %1282 = vmatmul.mubr.f32.gmra.mrb[0].mxu0 %v309
      %v1283 = vpop.f32.mrb[0].mxu0
      %v1284 = vadd.f32 %v899, %v1283
      %v1285 = vpop.f32.mrb[0].mxu0
      %1286 = vmatprep.mubr.f32.mxu0 %v592
      %1287 = vmatmul.mubr.f32.gmra.mrb[0].mxu0 %v313
      %v1288 = vpop.f32.mrb[0].mxu0
      %v1289 = vadd.f32 %v904, %v1288
      %v1290 = vpop.f32.mrb[0].mxu0
      %1291 = vmatprep.mubr.f32.mxu0 %v595
      %1292 = vmatmul.mubr.f32.gmra.mrb[0].mxu0 %v317
      %v1293 = vpop.f32.mrb[0].mxu0
      %v1294 = vadd.f32 %v909, %v1293
      %v1295 = vpop.f32.mrb[0].mxu0
      %1296 = vmatprep.mubr.f32.mxu0 %v598
      %1297 = vmatmul.mubr.f32.gmra.mrb[0].mxu0 %v321
      %v1298 = vpop.f32.mrb[0].mxu0
      %v1299 = vadd.f32 %v914, %v1298
      %v1300 = vpop.f32.mrb[0].mxu0
      %1301 = vmatprep.mubr.f32.mxu0 %v601
      %1302 = vmatmul.mubr.f32.gmra.mrb[0].mxu0 %v325
      %v1303 = vpop.f32.mrb[0].mxu0
      %v1304 = vadd.f32 %v919, %v1303
      %v1305 = vpop.f32.mrb[0].mxu0
      %1306 = vmatprep.mubr.f32.mxu0 %v604
      %1307 = vmatmul.mubr.f32.gmra.mrb[0].mxu0 %v329
      %v1308 = vpop.f32.mrb[0].mxu0
      %v1309 = vadd.f32 %v924, %v1308
      %v1310 = vpop.f32.mrb[0].mxu0
      %1311 = vmatprep.mubr.f32.mxu0 %v607
      %1312 = vmatmul.mubr.f32.gmra.mrb[0].mxu0 %v333
      %v1313 = vpop.f32.mrb[0].mxu0
      %v1314 = vadd.f32 %v929, %v1313
      %v1315 = vpop.f32.mrb[0].mxu0
      %1316 = vmatprep.mubr.f32.mxu0 %v610
      %1317 = vmatmul.mubr.f32.gmra.mrb[0].mxu0 %v337
      %v1318 = vpop.f32.mrb[0].mxu0
      %v1319 = vadd.f32 %v934, %v1318
      %v1320 = vpop.f32.mrb[0].mxu0
      %1321 = vmatprep.mubr.f32.mxu0 %v613
      %1322 = vmatmul.mubr.f32.gmra.mrb[0].mxu0 %v341
      %v1323 = vpop.f32.mrb[0].mxu0
      %v1324 = vadd.f32 %v939, %v1323
      %v1325 = vpop.f32.mrb[0].mxu0
      %1326 = vmatprep.mubr.f32.mxu0 %v616
      %1327 = vmatmul.mubr.f32.gmra.mrb[0].mxu0 %v345
      %v1328 = vpop.f32.mrb[0].mxu0
      %v1329 = vadd.f32 %v944, %v1328
      %v1330 = vpop.f32.mrb[0].mxu0
      %1331 = vmatprep.mubr.f32.mxu0 %v619
      %1332 = vmatmul.mubr.f32.gmra.mrb[0].mxu0 %v349
      %v1333 = vpop.f32.mrb[0].mxu0
      %v1334 = vadd.f32 %v949, %v1333
      %v1335 = vpop.f32.mrb[0].mxu0
      %1336 = vmatprep.mubr.f32.mxu0 %v622
      %1337 = vmatmul.mubr.f32.gmra.mrb[0].mxu0 %v353
      %v1338 = vpop.f32.mrb[0].mxu0
      %v1339 = vadd.f32 %v954, %v1338
      %v1340 = vpop.f32.mrb[0].mxu0
      %1341 = vmatprep.mubr.f32.mxu0 %v625
      %1342 = vmatmul.mubr.f32.gmra.mrb[0].mxu0 %v357
      %v1343 = vpop.f32.mrb[0].mxu0
      %v1344 = vadd.f32 %v959, %v1343
      %v1345 = vpop.f32.mrb[0].mxu0
      %1346 = vmatprep.mubr.f32.mxu0 %v628
      %1347 = vmatmul.mubr.f32.gmra.mrb[0].mxu0 %v361
      %v1348 = vpop.f32.mrb[0].mxu0
      %v1349 = vadd.f32 %v964, %v1348
      %v1350 = vpop.f32.mrb[0].mxu0
      %1351 = vmatprep.mubr.f32.mxu0 %v631
      %1352 = vmatmul.mubr.f32.gmra.mrb[0].mxu0 %v365
      %v1353 = vpop.f32.mrb[0].mxu0
      %v1354 = vadd.f32 %v969, %v1353
      %v1355 = vpop.f32.mrb[0].mxu0
      %1356 = vmatprep.mubr.f32.mxu0 %v634
      %1357 = vmatmul.mubr.f32.gmra.mrb[0].mxu0 %v369
      %v1358 = vpop.f32.mrb[0].mxu0
      %v1359 = vadd.f32 %v974, %v1358
      %v1360 = vpop.f32.mrb[0].mxu0
      %1361 = vmatprep.mubr.f32.mxu0 %v637
      %1362 = vmatmul.mubr.f32.gmra.mrb[0].mxu0 %v373
      %v1363 = vpop.f32.mrb[0].mxu0
      %v1364 = vadd.f32 %v979, %v1363
      %v1365 = vpop.f32.mrb[0].mxu0
      %1366 = vmatprep.mubr.f32.mxu0 %v640
      %1367 = vmatmul.mubr.f32.gmra.mrb[0].mxu0 %v377
      %v1368 = vpop.f32.mrb[0].mxu0
      %v1369 = vadd.f32 %v984, %v1368
      %v1370 = vpop.f32.mrb[0].mxu0
      %1371 = vmatprep.mubr.f32.mxu0 %v643
      %1372 = vmatmul.mubr.f32.gmra.mrb[0].mxu0 %v381
      %v1373 = vpop.f32.mrb[0].mxu0
      %v1374 = vadd.f32 %v989, %v1373
      %v1375 = vpop.f32.mrb[0].mxu0
      %1376 = vmatprep.mubr.f32.mxu0 %v646
      %1377 = vmatmul.mubr.f32.gmra.mrb[0].mxu0 %v385
      %v1378 = vpop.f32.mrb[0].mxu0
      %v1379 = vadd.f32 %v994, %v1378
      %v1380 = vpop.f32.mrb[0].mxu0
      %1381 = vmatprep.mubr.f32.mxu0 %v649
      %1382 = vmatmul.mubr.f32.gmra.mrb[0].mxu0 %v389
      %v1383 = vpop.f32.mrb[0].mxu0
      %v1384 = vadd.f32 %v999, %v1383
      %v1385 = vpop.f32.mrb[0].mxu0
      %1386 = vmatprep.mubr.f32.mxu0 %v652
      %1387 = vmatmul.mubr.f32.gmra.mrb[0].mxu0 %v393
      %v1388 = vpop.f32.mrb[0].mxu0
      %v1389 = vadd.f32 %v1004, %v1388
      %v1390 = vpop.f32.mrb[0].mxu0
      %1391 = vmatprep.mubr.f32.mxu0 %v655
      %1392 = vmatmul.mubr.f32.gmra.mrb[0].mxu0 %v397
      %v1393 = vpop.f32.mrb[0].mxu0
      %v1394 = vadd.f32 %v1009, %v1393
      %v1395 = vpop.f32.mrb[0].mxu0
      %1396 = vmatprep.mubr.f32.mxu0 %v658
      %1397 = vmatmul.mubr.f32.gmra.mrb[0].mxu0 %v401
      %v1398 = vpop.f32.mrb[0].mxu0
      %v1399 = vadd.f32 %v1014, %v1398
      %v1400 = vpop.f32.mrb[0].mxu0
      %1401 = vmatprep.mubr.f32.mxu0 %v661
      %1402 = vmatmul.mubr.f32.gmra.mrb[0].mxu0 %v405
      %v1403 = vpop.f32.mrb[0].mxu0
      %v1404 = vadd.f32 %v1019, %v1403
      %v1405 = vpop.f32.mrb[0].mxu0
      %1406 = vmatprep.mubr.f32.mxu0 %v664
      %1407 = vmatmul.mubr.f32.gmra.mrb[0].mxu0 %v409
      %v1408 = vpop.f32.mrb[0].mxu0
      %v1409 = vadd.f32 %v1024, %v1408
      %v1410 = vpop.f32.mrb[0].mxu0
      %1411 = vmatprep.mubr.f32.mxu0 %v667
      %1412 = vmatmul.mubr.f32.gmra.mrb[0].mxu0 %v413
      %v1413 = vpop.f32.mrb[0].mxu0
      %v1414 = vadd.f32 %v1029, %v1413
      %v1415 = vpop.f32.mrb[0].mxu0
      %1416 = vmatprep.mubr.f32.mxu0 %v670
      %1417 = vmatmul.mubr.f32.gmra.mrb[0].mxu0 %v417
      %v1418 = vpop.f32.mrb[0].mxu0
      %v1419 = vadd.f32 %v1034, %v1418
      %v1420 = vpop.f32.mrb[0].mxu0
      %1421 = vmatprep.mubr.f32.mxu0 %v673
      %1422 = vmatmul.mubr.f32.gmra.mrb[0].mxu0 %v421
      %v1423 = vpop.f32.mrb[0].mxu0
      %v1424 = vadd.f32 %v1039, %v1423
      %v1425 = vpop.f32.mrb[0].mxu0
      %1426 = vmatprep.mubr.f32.mxu0 %v676
      %1427 = vmatmul.mubr.f32.gmra.mrb[0].mxu0 %v425
      %v1428 = vpop.f32.mrb[0].mxu0
      %v1429 = vadd.f32 %v1044, %v1428
      %v1430 = vpop.f32.mrb[0].mxu0
      %1431 = vmatprep.mubr.f32.mxu0 %v679
      %1432 = vmatmul.mubr.f32.gmra.mrb[0].mxu0 %v429
      %v1433 = vpop.f32.mrb[0].mxu0
      %v1434 = vadd.f32 %v1049, %v1433
      %v1435 = vpop.f32.mrb[0].mxu0
      %1436 = vmatprep.mubr.f32.mxu0 %v682
      %1437 = vmatmul.mubr.f32.gmra.mrb[0].mxu0 %v433
      %v1438 = vpop.f32.mrb[0].mxu0
      %v1439 = vadd.f32 %v1054, %v1438
      %v1440 = vpop.f32.mrb[0].mxu0
      %1441 = vmatprep.mubr.f32.mxu0 %v685
      %1442 = vmatmul.mubr.f32.gmra.mrb[0].mxu0 %v437
      %v1443 = vpop.f32.mrb[0].mxu0
      %v1444 = vadd.f32 %v1059, %v1443
      %v1445 = vpop.f32.mrb[0].mxu0
      %1446 = vmatprep.mubr.f32.mxu0 %v688
      %1447 = vmatmul.mubr.f32.gmra.mrb[0].mxu0 %v441
      %v1448 = vpop.f32.mrb[0].mxu0
      %v1449 = vadd.f32 %v1064, %v1448
      %v1450 = vpop.f32.mrb[0].mxu0
      %1451 = vmatprep.mubr.f32.mxu0 %v691
      %1452 = vmatmul.mubr.f32.gmra.mrb[0].mxu0 %v445
      %v1453 = vpop.f32.mrb[0].mxu0
      %v1454 = vadd.f32 %v1069, %v1453
      %v1455 = vpop.f32.mrb[0].mxu0
      %1456 = vmatprep.mubr.f32.mxu0 %v694
      %1457 = vmatmul.mubr.f32.gmra.mrb[0].mxu0 %v449
      %v1458 = vpop.f32.mrb[0].mxu0
      %v1459 = vadd.f32 %v1074, %v1458
      %v1460 = vpop.f32.mrb[0].mxu0
      %1461 = vmatprep.mubr.f32.mxu0 %v697
      %1462 = vmatmul.mubr.f32.gmra.mrb[0].mxu0 %v453
      %v1463 = vpop.f32.mrb[0].mxu0
      %v1464 = vadd.f32 %v1079, %v1463
      %v1465 = vpop.f32.mrb[0].mxu0
      %1466 = vmatprep.mubr.f32.mxu0 %v700
      %1467 = vmatmul.mubr.f32.gmra.mrb[0].mxu0 %v457
      %v1468 = vpop.f32.mrb[0].mxu0
      %v1469 = vadd.f32 %v1084, %v1468
      %v1470 = vpop.f32.mrb[0].mxu0
      %1471 = vdwg.mxu0
      %v1472 = vld [vmem:[%s2] sm:$0xff]
      %v1473 = vld [vmem:[%s2 + $0x8] sm:$0xff]
      %v1474 = vld [vmem:[%s2 + $0x10] sm:$0xff]
      %v1475 = vld [vmem:[%s2 + $0x18] sm:$0xff]
      %v1476 = vld [vmem:[%s2 + $0x20] sm:$0xff]
      %v1477 = vld [vmem:[%s2 + $0x28] sm:$0xff]
      %v1478 = vld [vmem:[%s2 + $0x30] sm:$0xff]
      %v1479 = vld [vmem:[%s2 + $0x38] sm:$0xff]
      %v1480 = vld [vmem:[%s2 + $0x40] sm:$0x7f]
      %v1481 = vld [vmem:[%s2 + $0x48] sm:$0x7f]
      %v1482 = vld [vmem:[%s2 + $0x50] sm:$0x7f]
      %v1483 = vld [vmem:[%s2 + $0x58] sm:$0x7f]
      %v1484 = vmul.f32 %v1154, %v1154
      %v1485 = vmul.f32 %v1159, %v1159
      %v1486 = vmul.f32 %v1164, %v1164
      %v1487 = vmul.f32 %v1169, %v1169
      %v1488 = vmul.f32 %v1174, %v1174
      %v1489 = vmul.f32 %v1179, %v1179
      %v1490 = vmul.f32 %v1184, %v1184
      %v1491 = vmul.f32 %v1189, %v1189
      %v1492 = vmul.f32 %v1194, %v1194
      %v1493 = vmul.f32 %v1199, %v1199
      %v1494 = vmul.f32 %v1204, %v1204
      %v1495 = vmul.f32 %v1209, %v1209
      %v1496 = vmul.f32 %v1214, %v1214
      %v1497 = vmul.f32 %v1219, %v1219
      %v1498 = vmul.f32 %v1224, %v1224
      %v1499 = vmul.f32 %v1229, %v1229
      %v1500 = vmul.f32 %v1234, %v1234
      %v1501 = vmul.f32 %v1239, %v1239
      %v1502 = vmul.f32 %v1244, %v1244
      %v1503 = vmul.f32 %v1249, %v1249
      %v1504 = vmul.f32 %v1254, %v1254
      %v1505 = vmul.f32 %v1259, %v1259
      %v1506 = vmul.f32 %v1264, %v1264
      %v1507 = vmul.f32 %v1269, %v1269
      %v1508 = vmul.f32 %v1274, %v1274
      %v1509 = vmul.f32 %v1279, %v1279
      %v1510 = vmul.f32 %v1284, %v1284
      %v1511 = vmul.f32 %v1289, %v1289
      %v1512 = vmul.f32 %v1294, %v1294
      %v1513 = vmul.f32 %v1299, %v1299
      %v1514 = vmul.f32 %v1304, %v1304
      %v1515 = vmul.f32 %v1309, %v1309
      %v1516 = vmul.f32 %v1314, %v1314
      %v1517 = vmul.f32 %v1319, %v1319
      %v1518 = vmul.f32 %v1324, %v1324
      %v1519 = vmul.f32 %v1329, %v1329
      %v1520 = vmul.f32 %v1334, %v1334
      %v1521 = vmul.f32 %v1339, %v1339
      %v1522 = vmul.f32 %v1344, %v1344
      %v1523 = vmul.f32 %v1349, %v1349
      %v1524 = vmul.f32 %v1354, %v1354
      %v1525 = vmul.f32 %v1359, %v1359
      %v1526 = vmul.f32 %v1364, %v1364
      %v1527 = vmul.f32 %v1369, %v1369
      %v1528 = vmul.f32 %v1374, %v1374
      %v1529 = vmul.f32 %v1379, %v1379
      %v1530 = vmul.f32 %v1384, %v1384
      %v1531 = vmul.f32 %v1389, %v1389
      %v1532 = vmul.f32 %v1394, %v1394
      %v1533 = vmul.f32 %v1399, %v1399
      %v1534 = vmul.f32 %v1404, %v1404
      %v1535 = vmul.f32 %v1409, %v1409
      %v1536 = vmul.f32 %v1414, %v1414
      %v1537 = vmul.f32 %v1419, %v1419
      %v1538 = vmul.f32 %v1424, %v1424
      %v1539 = vmul.f32 %v1429, %v1429
      %v1540 = vmul.f32 %v1434, %v1434
      %v1541 = vmul.f32 %v1439, %v1439
      %v1542 = vmul.f32 %v1444, %v1444
      %v1543 = vmul.f32 %v1449, %v1449
      %v1544 = vmul.f32 %v1454, %v1454
      %v1545 = vmul.f32 %v1459, %v1459
      %v1546 = vmul.f32 %v1464, %v1464
      %v1547 = vmul.f32 %v1469, %v1469
      %1548 = vmatprep.subr.mxu0 0.0
      %1549 = vmatpush1.msra.mxu0 %v1484
      %1550 = vmatprep.subr.mxu0 0.0
      %1551 = vmatpush1.msra.mxu0 %v1485
      %1552 = vmatprep.subr.mxu0 0.0
      %1553 = vmatpush1.msra.mxu0 %v1486
      %1554 = vmatprep.subr.mxu0 0.0
      %1555 = vmatpush1.msra.mxu0 %v1487
      %1556 = vmatprep.subr.mxu0 0.0
      %1557 = vmatpush1.msra.mxu0 %v1488
      %1558 = vmatprep.subr.mxu0 0.0
      %1559 = vmatpush1.msra.mxu0 %v1489
      %1560 = vmatprep.subr.mxu0 0.0
      %1561 = vmatpush1.msra.mxu0 %v1490
      %1562 = vmatprep.subr.mxu0 0.0
      %1563 = vmatpush1.msra.mxu0 %v1491
      %1564 = vmatprep.subr.mxu0 0.0
      %1565 = vmatpush1.msra.mxu0 %v1492
      %1566 = vmatprep.subr.mxu0 0.0
      %1567 = vmatpush1.msra.mxu0 %v1493
      %1568 = vmatprep.subr.mxu0 0.0
      %1569 = vmatpush1.msra.mxu0 %v1494
      %1570 = vmatprep.subr.mxu0 0.0
      %1571 = vmatpush1.msra.mxu0 %v1495
      %1572 = vmatprep.subr.mxu0 0.0
      %1573 = vmatpush1.msra.mxu0 %v1496
      %1574 = vmatprep.subr.mxu0 0.0
      %1575 = vmatpush1.msra.mxu0 %v1497
      %1576 = vmatprep.subr.mxu0 0.0
      %1577 = vmatpush1.msra.mxu0 %v1498
      %1578 = vmatprep.subr.mxu0 0.0
      %1579 = vmatpush1.msra.mxu0 %v1499
      %1580 = vmatprep.subr.mxu0 0.0
      %1581 = vmatpush1.msra.mxu0 %v1500
      %1582 = vmatprep.subr.mxu0 0.0
      %1583 = vmatpush1.msra.mxu0 %v1501
      %1584 = vmatprep.subr.mxu0 0.0
      %1585 = vmatpush1.msra.mxu0 %v1502
      %1586 = vmatprep.subr.mxu0 0.0
      %1587 = vmatpush1.msra.mxu0 %v1503
      %1588 = vmatprep.subr.mxu0 0.0
      %1589 = vmatpush1.msra.mxu0 %v1504
      %1590 = vmatprep.subr.mxu0 0.0
      %1591 = vmatpush1.msra.mxu0 %v1505
      %1592 = vmatprep.subr.mxu0 0.0
      %1593 = vmatpush1.msra.mxu0 %v1506
      %1594 = vmatprep.subr.mxu0 0.0
      %1595 = vmatpush1.msra.mxu0 %v1507
      %1596 = vmatprep.subr.mxu0 0.0
      %1597 = vmatpush1.msra.mxu0 %v1508
      %1598 = vmatprep.subr.mxu0 0.0
      %1599 = vmatpush1.msra.mxu0 %v1509
      %1600 = vmatprep.subr.mxu0 0.0
      %1601 = vmatpush1.msra.mxu0 %v1510
      %1602 = vmatprep.subr.mxu0 0.0
      %1603 = vmatpush1.msra.mxu0 %v1511
      %1604 = vmatprep.subr.mxu0 0.0
      %1605 = vmatpush1.msra.mxu0 %v1512
      %1606 = vmatprep.subr.mxu0 0.0
      %1607 = vmatpush1.msra.mxu0 %v1513
      %1608 = vmatprep.subr.mxu0 0.0
      %1609 = vmatpush1.msra.mxu0 %v1514
      %1610 = vmatprep.subr.mxu0 0.0
      %1611 = vmatpush1.msra.mxu0 %v1515
      %1612 = vmatprep.mubr.f32.mxu0 %v1473
      %1613 = vmatmul.mubr.f32.gmra.mrb[0].mxu0 %v1472
      %v1614 = vpop.f32.mrb[0].mxu0
      %v1615 = vadd.f32 0.0, %v1614
      %v1616 = vpop.f32.mrb[0].mxu0
      %1617 = vmatprep.mubr.f32.mxu0 %v1477
      %1618 = vmatmul.mubr.f32.gmra.mrb[0].mxu0 %v1476
      %v1619 = vpop.f32.mrb[0].mxu0
      %v1620 = vadd.f32 0.0, %v1619
      %v1621 = vpop.f32.mrb[0].mxu0
      %1622 = vmatprep.mubr.f32.mxu0 %v1481
      %1623 = vmatmul.mubr.f32.gmra.mrb[0].mxu0 %v1480
      %v1624 = vpop.f32.mrb[0].mxu0
      %v1625 = vadd.f32 0.0, %v1624
      %v1626 = vpop.f32.mrb[0].mxu0
      %1627 = vdwg.mxu0
      %1628 = vmatprep.subr.mxu0 0.0
      %1629 = vmatpush1.msra.mxu0 %v1516
      %1630 = vmatprep.subr.mxu0 0.0
      %1631 = vmatpush1.msra.mxu0 %v1517
      %1632 = vmatprep.subr.mxu0 0.0
      %1633 = vmatpush1.msra.mxu0 %v1518
      %1634 = vmatprep.subr.mxu0 0.0
      %1635 = vmatpush1.msra.mxu0 %v1519
      %1636 = vmatprep.subr.mxu0 0.0
      %1637 = vmatpush1.msra.mxu0 %v1520
      %1638 = vmatprep.subr.mxu0 0.0
      %1639 = vmatpush1.msra.mxu0 %v1521
      %1640 = vmatprep.subr.mxu0 0.0
      %1641 = vmatpush1.msra.mxu0 %v1522
      %1642 = vmatprep.subr.mxu0 0.0
      %1643 = vmatpush1.msra.mxu0 %v1523
      %1644 = vmatprep.subr.mxu0 0.0
      %1645 = vmatpush1.msra.mxu0 %v1524
      %1646 = vmatprep.subr.mxu0 0.0
      %1647 = vmatpush1.msra.mxu0 %v1525
      %1648 = vmatprep.subr.mxu0 0.0
      %1649 = vmatpush1.msra.mxu0 %v1526
      %1650 = vmatprep.subr.mxu0 0.0
      %1651 = vmatpush1.msra.mxu0 %v1527
      %1652 = vmatprep.subr.mxu0 0.0
      %1653 = vmatpush1.msra.mxu0 %v1528
      %1654 = vmatprep.subr.mxu0 0.0
      %1655 = vmatpush1.msra.mxu0 %v1529
      %1656 = vmatprep.subr.mxu0 0.0
      %1657 = vmatpush1.msra.mxu0 %v1530
      %1658 = vmatprep.subr.mxu0 0.0
      %1659 = vmatpush1.msra.mxu0 %v1531
      %1660 = vmatprep.subr.mxu0 0.0
      %1661 = vmatpush1.msra.mxu0 %v1532
      %1662 = vmatprep.subr.mxu0 0.0
      %1663 = vmatpush1.msra.mxu0 %v1533
      %1664 = vmatprep.subr.mxu0 0.0
      %1665 = vmatpush1.msra.mxu0 %v1534
      %1666 = vmatprep.subr.mxu0 0.0
      %1667 = vmatpush1.msra.mxu0 %v1535
      %1668 = vmatprep.subr.mxu0 0.0
      %1669 = vmatpush1.msra.mxu0 %v1536
      %1670 = vmatprep.subr.mxu0 0.0
      %1671 = vmatpush1.msra.mxu0 %v1537
      %1672 = vmatprep.subr.mxu0 0.0
      %1673 = vmatpush1.msra.mxu0 %v1538
      %1674 = vmatprep.subr.mxu0 0.0
      %1675 = vmatpush1.msra.mxu0 %v1539
      %1676 = vmatprep.subr.mxu0 0.0
      %1677 = vmatpush1.msra.mxu0 %v1540
      %1678 = vmatprep.subr.mxu0 0.0
      %1679 = vmatpush1.msra.mxu0 %v1541
      %1680 = vmatprep.subr.mxu0 0.0
      %1681 = vmatpush1.msra.mxu0 %v1542
      %1682 = vmatprep.subr.mxu0 0.0
      %1683 = vmatpush1.msra.mxu0 %v1543
      %1684 = vmatprep.subr.mxu0 0.0
      %1685 = vmatpush1.msra.mxu0 %v1544
      %1686 = vmatprep.subr.mxu0 0.0
      %1687 = vmatpush1.msra.mxu0 %v1545
      %1688 = vmatprep.subr.mxu0 0.0
      %1689 = vmatpush1.msra.mxu0 %v1546
      %1690 = vmatprep.subr.mxu0 0.0
      %1691 = vmatpush1.msra.mxu0 %v1547
      %1692 = vmatprep.mubr.f32.mxu0 %v1475
      %1693 = vmatmul.mubr.f32.gmra.mrb[0].mxu0 %v1474
      %v1694 = vpop.f32.mrb[0].mxu0
      %v1695 = vadd.f32 %v1615, %v1694
      %v1696 = vpop.f32.mrb[0].mxu0
      %1697 = vmatprep.mubr.f32.mxu0 %v1479
      %1698 = vmatmul.mubr.f32.gmra.mrb[0].mxu0 %v1478
      %v1699 = vpop.f32.mrb[0].mxu0
      %v1700 = vadd.f32 %v1620, %v1699
      %v1701 = vpop.f32.mrb[0].mxu0
      %1702 = vmatprep.mubr.f32.mxu0 %v1483
      %1703 = vmatmul.mubr.f32.gmra.mrb[0].mxu0 %v1482
      %v1704 = vpop.f32.mrb[0].mxu0
      %v1705 = vadd.f32 %v1625, %v1704
      %v1706 = vpop.f32.mrb[0].mxu0
      %1707 = vdwg.mxu0
      %v1708 = vmax.f32 %v1695, 1.1920929e-07
      %v1709 = vmax.f32 %v1700, 1.1920929e-07
      %v1710 = vmax.f32 %v1705, 1.1920929e-07
      %v1711 = vlog2.pop %v1708
      %v1712 = vmul.f32 %v1711, 0.6931472
      %v1713 = vlog2.pop %v1709
      %v1714 = vmul.f32 %v1713, 0.6931472
      %v1715 = vlog2.pop %v1710
      %v1716 = vmul.f32 %v1715, 0.6931472
      %s1717 = smul.u32 %s19, 128
      %s1718 = sshra.s32 %s1717, 7
      %s1719 = sand.u32 %s1717, 127
      %s1720 = scalar_lea.vmem %s193, %s1718
      %1721 = vst [vmem:[%s1720] sm:$0xff] %v1712
      %1722 = vst [vmem:[%s1720 + $0x8] sm:$0xff] %v1714
      %1723 = vst [vmem:[%s1720 + $0x10] sm:$0x7f] %v1716
      %v1724 = vlaneseq
      %v1725 = vand.u32 %v1724, 127
      %v1726 = vstv %s1717
      %v1727 = vadd.s32 %v1725, %v1726
      %vm1728 = vcmp.lt.s32.totalorder %v1727, 23
      %v1729 = vld [vmem:[#allocation2] sm:$0xff]
      %v1730 = vld [vmem:[#allocation2 + $0x8] sm:$0xff]
      %v1731 = vld [vmem:[#allocation2 + $0x10] sm:$0x7f]
      %v1732 = vsel %vm1728, %v1712, 0.0
      %v1733 = vsel %vm1728, %v1714, 0.0
      %v1734 = vsel %vm1728, %v1716, 0.0
      %1735 = vadd.xlane.f32.xlu0 %v1732
      %v1736 = vpop.xlane.xlu0 %1735
      %1737 = vadd.xlane.f32.xlu0 %v1733
      %v1738 = vpop.xlane.xlu0 %1737
      %vm1739 = vcmask 1046528
      %v1740 = vsel %vm1739, %v1734, 0.0
      %1741 = vadd.xlane.f32.xlu0 %v1740
      %v1742 = vpop.xlane.xlu0 %1741
      %v1743 = vadd.f32 %v1729, %v1736
      %v1744 = vadd.f32 %v1730, %v1738
      %v1745 = vadd.f32 %v1731, %v1742
      %vm1746 = vcmask 7168
      %1747 = vst.msk [vmem:[#allocation2] sm:$0xff] %vm1746, %v1743
      %1748 = vst.msk [vmem:[#allocation2 + $0x8] sm:$0xff] %vm1746, %v1744
      %vm1749 = vcmask 6144
      %1750 = vst.msk [vmem:[#allocation2 + $0x10] sm:$0x7f] %vm1749, %v1745
      // Predicated region
      $region37: #{tpu_custom_call.1} parent=31 // pred_check
        %p1751 = pneg %p194
      $region38: #{tpu_custom_call.1} parent=31 // pred_check_branch
        %1753 = sbr.rel (%p1751) target = $region40
      $region39: #{tpu_custom_call.1} parent=31 // pred_region
        %v1754 = vld [vmem:[#allocation2] sm:$0xff]
        %v1755 = vld [vmem:[#allocation2 + $0x8] sm:$0xff]
        %v1756 = vld [vmem:[#allocation2 + $0x10] sm:$0x7f]
        %v1757 = vmul.f32 %v1754, 0.04347826
        %v1758 = vmul.f32 %v1755, 0.04347826
        %v1759 = vmul.f32 %v1756, 0.04347826
        %v1760 = vld [vmem:[%s193] sm:$0xff]
        %v1761 = vld [vmem:[%s193 + $0x8] sm:$0xff]
        %v1762 = vld [vmem:[%s193 + $0x10] sm:$0x7f]
        %1764 = vset.pattern.permute.xlu0 0
        %1765 = vperm.xlu0 %1764, %v1757
        %v1766 = vpop.permute.xlu0 %1765
        %1769 = vset.pattern.permute.xlu0 0
        %1770 = vperm.xlu0 %1769, %v1758
        %v1771 = vpop.permute.xlu0 %1770
        %1774 = vset.pattern.permute.xlu0 0
        %1775 = vperm.xlu0 %1774, %v1759
        %v1776 = vpop.permute.xlu0 %1775
        %v1778 = vsub.f32 %v1760, %v1766
        %v1779 = vsub.f32 %v1761, %v1771
        %v1780 = vsub.f32 %v1762, %v1776
        %1781 = vst [vmem:[%s193] sm:$0xff] %v1778
        %1782 = vst [vmem:[%s193 + $0x8] sm:$0xff] %v1779
        %1783 = vst [vmem:[%s193 + $0x10] sm:$0x7f] %v1780
      $region40: #{tpu_custom_call.1} parent=31 // pred_fallthru
        _
      %p1784 = scmp.lt.s32.totalorder %s18, 1
      %s1785 = scalar_select %p1784, %s18, 1
      %s1786 = smul.addr %s1785, 3
      %s1787 = smul.addr %s1786, 8
      %s1788 = scalar_lea.vmem %s3, %s1787
      // Predicated region
      $region41: #{tpu_custom_call.1} parent=31 // pred_check
        %p1789 = pneg %p114
      $region42: #{tpu_custom_call.1} parent=31 // pred_check_branch
        %1791 = sbr.rel (%p1789) target = $region44
      $region43: #{tpu_custom_call.1} parent=31 // pred_region
        _
      $region44: #{tpu_custom_call.1} parent=31 // pred_fallthru
        _
    $region32: #{tpu_custom_call.1} parent=5 // pred_fallthru
      _
    %p1792 = scmp.le.s32.totalorder 2, %s9
    // Predicated region
    $region45: #{tpu_custom_call.1} parent=5 // pred_check
      %p1793 = pneg %p1792
    $region46: #{tpu_custom_call.1} parent=5 // pred_check_branch
      %1795 = sbr.rel (%p1793) target = $region48
    $region47: #{tpu_custom_call.1} parent=5 // pred_region
      %s1796 = ssub.s32 %s9, 2
      // Predicated region
      $region49: #{tpu_custom_call.1} parent=47 // pred_check
        %p1797 = pneg %p120
      $region50: #{tpu_custom_call.1} parent=47 // pred_check_branch
        %1799 = sbr.rel (%p1797) target = $region52
      $region51: #{tpu_custom_call.1} parent=47 // pred_region
        %p1800 = scmp.lt.s32.totalorder %s20, 1
        %s1801 = scalar_select %p1800, %s20, 1
        %s1802 = smul.addr %s1801, 3
        %s1803 = smul.addr %s1802, 8
        %s1804 = scalar_lea.vmem %s3, %s1803
      $region52: #{tpu_custom_call.1} parent=47 // pred_fallthru
        _
    $region48: #{tpu_custom_call.1} parent=5 // pred_fallthru
      _
  $region6: #{tpu_custom_call.1} parent=0 // loop_footer
    %s13 = sadd.s32 1, %s9
  $region7: #{tpu_custom_call.1} parent=0 // loop_footer_branch
    %8 = sbr.rel target = $region3
  $region8: #{tpu_custom_call.1} parent=0 // loop_exit
    _

</llo_original>
